<compile_context>
chip_gen: v6e
topology: v6e:2x2x1
jax: 0.10.0
libtpu: 0.0.40
codegen_flags: <defaults>
</compile_context>

<pallas_src>
import jax
import jax.numpy as jnp
from jax.experimental import pallas as pl
from jax.experimental.pallas import tpu as pltpu


def _round_up(x, m):
    return ((x + m - 1) // m) * m


def _leaky_relu(h, slope=0.2):
    return jnp.where(h >= 0, h, slope * h)


def mlp_kernel(x_ref,
               w1_ref, b1_ref,
               w2_ref, b2_ref,
               w3_ref, b3_ref,
               w4_ref, b4_ref,
               w5_ref,
               o_ref):
    """One batch tile: 4x (Linear + LeakyReLU(0.2)) then Linear(base, 1, bias=False).

    x is cast to bf16 in-kernel (MXU-native); accumulation / activations are f32.
    The final out_features=1 layer is a VPU multiply + cross-lane reduce, stored lane-dense.
    Garbage rows of a partial edge x-block flow through pure arithmetic and are discarded
    by the wrapper slice.
    """
    h = x_ref[...].astype(jnp.bfloat16)                                     # (TB, F) bf16

    a = jnp.dot(h, w1_ref[...], preferred_element_type=jnp.float32) + b1_ref[...]
    a = _leaky_relu(a)

    a = jnp.dot(a.astype(jnp.bfloat16), w2_ref[...],
                preferred_element_type=jnp.float32) + b2_ref[...]
    a = _leaky_relu(a)

    a = jnp.dot(a.astype(jnp.bfloat16), w3_ref[...],
                preferred_element_type=jnp.float32) + b3_ref[...]
    a = _leaky_relu(a)

    a = jnp.dot(a.astype(jnp.bfloat16), w4_ref[...],
                preferred_element_type=jnp.float32) + b4_ref[...]
    a = _leaky_relu(a)                                                      # (TB, H) f32

    # Final layer H -> 1 (no bias): elementwise mul + lane reduction, lane-dense store.
    o = jnp.sum(a * w5_ref[...], axis=-1)                                   # (TB,) f32
    o_ref[...] = o.reshape(o_ref.shape)                                     # (1, 1, TB)


def _choose_tile_b(batch, feat, x_itemsize, desired=1024):
    """Batch tile: multiple of 128, large enough to amortize per-step overhead, small enough
    that 2 double-buffered (TB, F) x tiles stay under ~8 MiB (safe for v5e's 16 MiB scoped
    default VMEM and v7x's 64 MiB physical VMEM), and never collapsing a large batch into a
    single grid step (keeps both v7x TensorCores busy)."""
    budget = 8 * 1024 * 1024
    cap = (budget // (2 * feat * x_itemsize)) // 128 * 128
    cap = max(128, int(cap))
    tb = min(desired, cap)
    # >= 2 grid steps when the batch allows it (v7x has 2 TCs; no-op for small batches).
    tb = min(tb, _round_up(pl.cdiv(batch, 2), 128))
    return max(128, tb)


def mlp_forward(x, params, tile_b=None):
    """x: [B, C, H, W] float32.  params: dict of weights/biases (see init_mlp_params)."""
    B = x.shape[0]
    x_flat = x.reshape(B, -1)                         # free reshape; NO cast / pad in HBM
    F = x_flat.shape[1]
    hidden = params["w1"].shape[1]

    if tile_b is None:
        tile_b = _choose_tile_b(B, F, x_flat.dtype.itemsize)
    num_tiles = pl.cdiv(B, tile_b)

    w1, b1 = params["w1"], params["b1"]
    w2, b2 = params["w2"], params["b2"]
    w3, b3 = params["w3"], params["b3"]
    w4, b4 = params["w4"], params["b4"]
    w5 = params["w5"]

    # Weights / biases (all 2-D): full-array blocks pinned at block index (0, 0)
    # -> VMEM-resident across grid steps.
    def resident(arr):
        return pl.BlockSpec(arr.shape, lambda i: (0, 0))

    flops = 2 * B * (F * hidden + 3 * hidden * hidden + hidden)
    bytes_accessed = (int(x_flat.size) * x_flat.dtype.itemsize
                      + sum(int(p.size) * p.dtype.itemsize
                            for p in (w1, b1, w2, b2, w3, b3, w4, b4, w5))
                      + num_tiles * tile_b * 4)

    out = pl.pallas_call(
        mlp_kernel,
        out_shape=jax.ShapeDtypeStruct((num_tiles, 1, tile_b), jnp.float32),
        grid=(num_tiles,),
        in_specs=[
            pl.BlockSpec((tile_b, F), lambda i: (i, 0)),
            resident(w1), resident(b1),
            resident(w2), resident(b2),
            resident(w3), resident(b3),
            resident(w4), resident(b4),
            resident(w5),
        ],
        out_specs=pl.BlockSpec((1, 1, tile_b), lambda i: (i, 0, 0)),
        compiler_params=pltpu.CompilerParams(
            dimension_semantics=("parallel",)),
        cost_estimate=pl.CostEstimate(
            flops=int(flops), transcendentals=0, bytes_accessed=int(bytes_accessed)),
    )(x_flat, w1, b1, w2, b2, w3, b3, w4, b4, w5)

    # (num_tiles, 1, TB) -> (B, 1): tiles cover contiguous batch rows; drop edge garbage rows.
    return out.reshape(num_tiles * tile_b, 1)[:B]


def init_mlp_params(key, in_channels, num_layers=4, base_channels=128):
    """Deterministic synthetic parameters with the same shapes as the PyTorch module.

    PyTorch nn.Linear stores weight as (out, in); we transpose so the kernel computes
    x @ W with W of shape (in, out). Matmul weights are cast to bf16 (MXU-native);
    biases and the final 1-wide row stay f32.
    """
    params = {}
    in_c = in_channels
    out_c = base_channels
    keys = jax.random.split(key, num_layers + 1)
    for i in range(num_layers):
        kw, kb = jax.random.split(keys[i])
        w_torch = jax.random.normal(kw, (out_c, in_c), jnp.float32) * 0.02   # (out, in)
        b = jax.random.normal(kb, (out_c,), jnp.float32) * 0.02
        params[f"w{i + 1}"] = jnp.transpose(w_torch).astype(jnp.bfloat16)    # (in, out) bf16
        params[f"b{i + 1}"] = b.reshape(1, out_c)                            # (1, out) f32
        in_c = out_c
    w_last = jax.random.normal(keys[-1], (1, base_channels), jnp.float32) * 0.02
    params["w5"] = w_last                                                    # (1, base) f32 row
    return params


def mlp_reference(x, params):
    """Pure-JAX reference with the same (bf16 matmul, f32 accumulate) precision."""
    h = x.reshape(x.shape[0], -1).astype(jnp.bfloat16)
    a = None
    for i in range(1, 5):
        a = jnp.dot(h, params[f"w{i}"], preferred_element_type=jnp.float32) + params[f"b{i}"]
        a = jnp.where(a >= 0, a, 0.2 * a)
        h = a.astype(jnp.bfloat16)
    return jnp.sum(a * params["w5"], axis=-1, keepdims=True)


if __name__ == "__main__":
    key = jax.random.PRNGKey(0)
    k_x, k_p = jax.random.split(key)

    # Small shapes: x = [B=2, C=4, H=16, W=16] -> flattened features = 1024.
    B, C, H, W = 2, 4, 16, 16
    in_channels = C * H * W
    base_channels = 128

    x = jax.random.normal(k_x, (B, C, H, W), jnp.float32)
    params = init_mlp_params(k_p, in_channels, num_layers=4, base_channels=base_channels)

    out = mlp_forward(x, params)
    out = jax.block_until_ready(out)

    ref = mlp_reference(x, params)
    assert out.shape == (B, 1)
    assert jnp.allclose(out, ref, atol=1e-3, rtol=1e-2), "Pallas output mismatch vs reference"

    print("KERNEL_OK")
</pallas_src>

<mosaic_0001>
module attributes {stable_mosaic.version = 11 : i64} {
  func.func @mlp_kernel(%arg0: i32, %arg1: memref<128x1024xf32, #tpu.memory_space<vmem>>, %arg2: memref<1024x128xbf16, #tpu.memory_space<vmem>>, %arg3: memref<1x128xf32, #tpu.memory_space<vmem>>, %arg4: memref<128x128xbf16, #tpu.memory_space<vmem>>, %arg5: memref<1x128xf32, #tpu.memory_space<vmem>>, %arg6: memref<128x128xbf16, #tpu.memory_space<vmem>>, %arg7: memref<1x128xf32, #tpu.memory_space<vmem>>, %arg8: memref<128x128xbf16, #tpu.memory_space<vmem>>, %arg9: memref<1x128xf32, #tpu.memory_space<vmem>>, %arg10: memref<1x128xf32, #tpu.memory_space<vmem>>, %arg11: memref<1x1x128xf32, #tpu.memory_space<vmem>>) attributes {dimension_semantics = [#tpu.dimension_semantics<parallel>], iteration_bounds = array<i64: 1>, scalar_prefetch = 0 : i64, scratch_operands = 0 : i64, tpu.core_type = #tpu.core_type<tc>, window_params = [{transform_indices = @transform_0, window_bounds = array<i64: 128, 1024>}, {pipeline_mode = #tpu.pipeline_mode<synchronous>, transform_indices = @transform_1, window_bounds = array<i64: 1024, 128>}, {pipeline_mode = #tpu.pipeline_mode<synchronous>, transform_indices = @transform_2, window_bounds = array<i64: 1, 128>}, {pipeline_mode = #tpu.pipeline_mode<synchronous>, transform_indices = @transform_3, window_bounds = array<i64: 128, 128>}, {pipeline_mode = #tpu.pipeline_mode<synchronous>, transform_indices = @transform_4, window_bounds = array<i64: 1, 128>}, {pipeline_mode = #tpu.pipeline_mode<synchronous>, transform_indices = @transform_5, window_bounds = array<i64: 128, 128>}, {pipeline_mode = #tpu.pipeline_mode<synchronous>, transform_indices = @transform_6, window_bounds = array<i64: 1, 128>}, {pipeline_mode = #tpu.pipeline_mode<synchronous>, transform_indices = @transform_7, window_bounds = array<i64: 128, 128>}, {pipeline_mode = #tpu.pipeline_mode<synchronous>, transform_indices = @transform_8, window_bounds = array<i64: 1, 128>}, {pipeline_mode = #tpu.pipeline_mode<synchronous>, transform_indices = @transform_9, window_bounds = array<i64: 1, 128>}, {transform_indices = @transform_10, window_bounds = array<i64: 1, 1, 128>}]} {
    %c0 = arith.constant 0 : index
    %c0_0 = arith.constant 0 : index
    %0 = vector.load %arg1[%c0, %c0_0] : memref<128x1024xf32, #tpu.memory_space<vmem>>, vector<128x1024xf32>
    %1 = arith.truncf %0 : vector<128x1024xf32> to vector<128x1024xbf16>
    %c0_1 = arith.constant 0 : index
    %c0_2 = arith.constant 0 : index
    %2 = vector.load %arg2[%c0_1, %c0_2] : memref<1024x128xbf16, #tpu.memory_space<vmem>>, vector<1024x128xbf16>
    %cst = arith.constant dense<0.000000e+00> : vector<128x128xf32>
    %3 = tpu.matmul %1, %2, %cst {dimension_numbers = #tpu.dot_dimension_numbers<[1], [0], [0], [1], [0, 0, 1, 1], [], []>} : vector<128x1024xbf16>, vector<1024x128xbf16>, vector<128x128xf32> -> vector<128x128xf32>
    %c0_3 = arith.constant 0 : index
    %c0_4 = arith.constant 0 : index
    %4 = vector.load %arg3[%c0_3, %c0_4] : memref<1x128xf32, #tpu.memory_space<vmem>>, vector<1x128xf32>
    %5 = vector.broadcast %4 : vector<1x128xf32> to vector<128x128xf32>
    %6 = arith.addf %3, %5 : vector<128x128xf32>
    %cst_5 = arith.constant 0.000000e+00 : f32
    %7 = vector.broadcast %cst_5 : f32 to vector<128x128xf32>
    %8 = arith.cmpf oge, %6, %7 : vector<128x128xf32>
    %cst_6 = arith.constant 2.000000e-01 : f32
    %9 = vector.broadcast %cst_6 : f32 to vector<128x128xf32>
    %10 = arith.mulf %9, %6 : vector<128x128xf32>
    %11 = arith.select %8, %6, %10 : vector<128x128xi1>, vector<128x128xf32>
    %12 = arith.truncf %11 : vector<128x128xf32> to vector<128x128xbf16>
    %c0_7 = arith.constant 0 : index
    %c0_8 = arith.constant 0 : index
    %13 = vector.load %arg4[%c0_7, %c0_8] : memref<128x128xbf16, #tpu.memory_space<vmem>>, vector<128x128xbf16>
    %cst_9 = arith.constant dense<0.000000e+00> : vector<128x128xf32>
    %14 = tpu.matmul %12, %13, %cst_9 {dimension_numbers = #tpu.dot_dimension_numbers<[1], [0], [0], [1], [0, 0, 1, 1], [], []>} : vector<128x128xbf16>, vector<128x128xbf16>, vector<128x128xf32> -> vector<128x128xf32>
    %c0_10 = arith.constant 0 : index
    %c0_11 = arith.constant 0 : index
    %15 = vector.load %arg5[%c0_10, %c0_11] : memref<1x128xf32, #tpu.memory_space<vmem>>, vector<1x128xf32>
    %16 = vector.broadcast %15 : vector<1x128xf32> to vector<128x128xf32>
    %17 = arith.addf %14, %16 : vector<128x128xf32>
    %cst_12 = arith.constant 0.000000e+00 : f32
    %18 = vector.broadcast %cst_12 : f32 to vector<128x128xf32>
    %19 = arith.cmpf oge, %17, %18 : vector<128x128xf32>
    %cst_13 = arith.constant 2.000000e-01 : f32
    %20 = vector.broadcast %cst_13 : f32 to vector<128x128xf32>
    %21 = arith.mulf %20, %17 : vector<128x128xf32>
    %22 = arith.select %19, %17, %21 : vector<128x128xi1>, vector<128x128xf32>
    %23 = arith.truncf %22 : vector<128x128xf32> to vector<128x128xbf16>
    %c0_14 = arith.constant 0 : index
    %c0_15 = arith.constant 0 : index
    %24 = vector.load %arg6[%c0_14, %c0_15] : memref<128x128xbf16, #tpu.memory_space<vmem>>, vector<128x128xbf16>
    %cst_16 = arith.constant dense<0.000000e+00> : vector<128x128xf32>
    %25 = tpu.matmul %23, %24, %cst_16 {dimension_numbers = #tpu.dot_dimension_numbers<[1], [0], [0], [1], [0, 0, 1, 1], [], []>} : vector<128x128xbf16>, vector<128x128xbf16>, vector<128x128xf32> -> vector<128x128xf32>
    %c0_17 = arith.constant 0 : index
    %c0_18 = arith.constant 0 : index
    %26 = vector.load %arg7[%c0_17, %c0_18] : memref<1x128xf32, #tpu.memory_space<vmem>>, vector<1x128xf32>
    %27 = vector.broadcast %26 : vector<1x128xf32> to vector<128x128xf32>
    %28 = arith.addf %25, %27 : vector<128x128xf32>
    %cst_19 = arith.constant 0.000000e+00 : f32
    %29 = vector.broadcast %cst_19 : f32 to vector<128x128xf32>
    %30 = arith.cmpf oge, %28, %29 : vector<128x128xf32>
    %cst_20 = arith.constant 2.000000e-01 : f32
    %31 = vector.broadcast %cst_20 : f32 to vector<128x128xf32>
    %32 = arith.mulf %31, %28 : vector<128x128xf32>
    %33 = arith.select %30, %28, %32 : vector<128x128xi1>, vector<128x128xf32>
    %34 = arith.truncf %33 : vector<128x128xf32> to vector<128x128xbf16>
    %c0_21 = arith.constant 0 : index
    %c0_22 = arith.constant 0 : index
    %35 = vector.load %arg8[%c0_21, %c0_22] : memref<128x128xbf16, #tpu.memory_space<vmem>>, vector<128x128xbf16>
    %cst_23 = arith.constant dense<0.000000e+00> : vector<128x128xf32>
    %36 = tpu.matmul %34, %35, %cst_23 {dimension_numbers = #tpu.dot_dimension_numbers<[1], [0], [0], [1], [0, 0, 1, 1], [], []>} : vector<128x128xbf16>, vector<128x128xbf16>, vector<128x128xf32> -> vector<128x128xf32>
    %c0_24 = arith.constant 0 : index
    %c0_25 = arith.constant 0 : index
    %37 = vector.load %arg9[%c0_24, %c0_25] : memref<1x128xf32, #tpu.memory_space<vmem>>, vector<1x128xf32>
    %38 = vector.broadcast %37 : vector<1x128xf32> to vector<128x128xf32>
    %39 = arith.addf %36, %38 : vector<128x128xf32>
    %cst_26 = arith.constant 0.000000e+00 : f32
    %40 = vector.broadcast %cst_26 : f32 to vector<128x128xf32>
    %41 = arith.cmpf oge, %39, %40 : vector<128x128xf32>
    %cst_27 = arith.constant 2.000000e-01 : f32
    %42 = vector.broadcast %cst_27 : f32 to vector<128x128xf32>
    %43 = arith.mulf %42, %39 : vector<128x128xf32>
    %44 = arith.select %41, %39, %43 : vector<128x128xi1>, vector<128x128xf32>
    %c0_28 = arith.constant 0 : index
    %c0_29 = arith.constant 0 : index
    %45 = vector.load %arg10[%c0_28, %c0_29] : memref<1x128xf32, #tpu.memory_space<vmem>>, vector<1x128xf32>
    %46 = vector.broadcast %45 : vector<1x128xf32> to vector<128x128xf32>
    %47 = arith.mulf %44, %46 : vector<128x128xf32>
    %cst_30 = arith.constant dense<0.000000e+00> : vector<128xf32>
    %48 = vector.multi_reduction <add>, %47, %cst_30 [1] : vector<128x128xf32> to vector<128xf32>
    %49 = vector.shape_cast %48 : vector<128xf32> to vector<1x1x128xf32>
    %c0_31 = arith.constant 0 : index
    %c0_32 = arith.constant 0 : index
    %c0_33 = arith.constant 0 : index
    %50 = vector.load %arg11[%c0_31, %c0_32, %c0_33] : memref<1x1x128xf32, #tpu.memory_space<vmem>>, vector<1x1x128xf32>
    tpu.vector_store %arg11[%c0_31, %c0_32, %c0_33], %49 {strides = array<i32>} : memref<1x1x128xf32, #tpu.memory_space<vmem>>, vector<1x1x128xf32>,
    return
  }
  func.func @transform_0(%arg0: i32) -> (i32, i32) {
    %c0_i32 = arith.constant 0 : i32
    %c0_i32_0 = arith.constant 0 : i32
    return %arg0, %c0_i32 : i32, i32
  }
  func.func @transform_1(%arg0: i32) -> (i32, i32) {
    %c0_i32 = arith.constant 0 : i32
    %c0_i32_0 = arith.constant 0 : i32
    %c0_i32_1 = arith.constant 0 : i32
    return %c0_i32, %c0_i32_0 : i32, i32
  }
  func.func @transform_2(%arg0: i32) -> (i32, i32) {
    %c0_i32 = arith.constant 0 : i32
    %c0_i32_0 = arith.constant 0 : i32
    %c0_i32_1 = arith.constant 0 : i32
    return %c0_i32, %c0_i32_0 : i32, i32
  }
  func.func @transform_3(%arg0: i32) -> (i32, i32) {
    %c0_i32 = arith.constant 0 : i32
    %c0_i32_0 = arith.constant 0 : i32
    %c0_i32_1 = arith.constant 0 : i32
    return %c0_i32, %c0_i32_0 : i32, i32
  }
  func.func @transform_4(%arg0: i32) -> (i32, i32) {
    %c0_i32 = arith.constant 0 : i32
    %c0_i32_0 = arith.constant 0 : i32
    %c0_i32_1 = arith.constant 0 : i32
    return %c0_i32, %c0_i32_0 : i32, i32
  }
  func.func @transform_5(%arg0: i32) -> (i32, i32) {
    %c0_i32 = arith.constant 0 : i32
    %c0_i32_0 = arith.constant 0 : i32
    %c0_i32_1 = arith.constant 0 : i32
    return %c0_i32, %c0_i32_0 : i32, i32
  }
  func.func @transform_6(%arg0: i32) -> (i32, i32) {
    %c0_i32 = arith.constant 0 : i32
    %c0_i32_0 = arith.constant 0 : i32
    %c0_i32_1 = arith.constant 0 : i32
    return %c0_i32, %c0_i32_0 : i32, i32
  }
  func.func @transform_7(%arg0: i32) -> (i32, i32) {
    %c0_i32 = arith.constant 0 : i32
    %c0_i32_0 = arith.constant 0 : i32
    %c0_i32_1 = arith.constant 0 : i32
    return %c0_i32, %c0_i32_0 : i32, i32
  }
  func.func @transform_8(%arg0: i32) -> (i32, i32) {
    %c0_i32 = arith.constant 0 : i32
    %c0_i32_0 = arith.constant 0 : i32
    %c0_i32_1 = arith.constant 0 : i32
    return %c0_i32, %c0_i32_0 : i32, i32
  }
  func.func @transform_9(%arg0: i32) -> (i32, i32) {
    %c0_i32 = arith.constant 0 : i32
    %c0_i32_0 = arith.constant 0 : i32
    %c0_i32_1 = arith.constant 0 : i32
    return %c0_i32, %c0_i32_0 : i32, i32
  }
  func.func @transform_10(%arg0: i32) -> (i32, i32, i32) {
    %c0_i32 = arith.constant 0 : i32
    %c0_i32_0 = arith.constant 0 : i32
    %c0_i32_1 = arith.constant 0 : i32
    return %arg0, %c0_i32, %c0_i32_0 : i32, i32, i32
  }
}

</mosaic_0001>

<llo_original>
// kernel: tpu_custom_call.1
$region0: #{tpu_custom_call.1}
  #allocation0 [shape = 'u32[]', space=smem, size = 0x4, offset = 0x4, fixed_abs, tag = 'smem constant byte address 0x4 - core index']
  #allocation1 [shape = 'u32[144,128]{1,0:T(1,128)}', space=vmem, size = 0x12000, scoped, tag = 'internal scratch']
  %s0 = inlined_call_operand.hbm [shape: f32[2,1024], index: 0, kind: input, shape index: {}]
  %s1 = inlined_call_operand.hbm [shape: bf16[1024,128], index: 1, kind: input, shape index: {}]
  %s2 = inlined_call_operand.vmem [shape: f32[1,128], index: 2, kind: input, shape index: {}]
  %s3 = inlined_call_operand.hbm [shape: bf16[128,128], index: 3, kind: input, shape index: {}]
  %s4 = inlined_call_operand.vmem [shape: f32[1,128], index: 4, kind: input, shape index: {}]
  %s5 = inlined_call_operand.hbm [shape: bf16[128,128], index: 5, kind: input, shape index: {}]
  %s6 = inlined_call_operand.vmem [shape: f32[1,128], index: 6, kind: input, shape index: {}]
  %s7 = inlined_call_operand.hbm [shape: bf16[128,128], index: 7, kind: input, shape index: {}]
  %s8 = inlined_call_operand.vmem [shape: f32[1,128], index: 8, kind: input, shape index: {}]
  %s9 = inlined_call_operand.vmem [shape: f32[1,128], index: 9, kind: input, shape index: {}]
  %s10 = inlined_call_operand.hbm [shape: f32[1,1,128], index: 10, kind: output, shape index: {}]
  %s11 = sld [smem:[#allocation0]]
  $region70: #{tpu_custom_call.1} parent=0
    _
  %s13 = ssub.s32 1, %s11
  %s14 = scalar_select 0, %s13, %s11
  $region1: #{tpu_custom_call.1} parent=0
    #allocation2 [shape = 'u8[524288]{0}', space=vmem, size = 0x80000, scoped, tag = 'input window, operand 0, single buffered']
    #allocation3 [shape = 's32[1]{0}', space=sflag, size = 0x4, scoped, tag = 'scoped memory for tpu_custom_call.1']
    #allocation4 [shape = 's32[1]{0}', space=sflag, size = 0x4, scoped, tag = 'scoped memory for tpu_custom_call.1']
    #allocation5 [shape = 'u8[262144]{0}', space=vmem, size = 0x40000, scoped, tag = 'input window, operand 1, single buffered']
    #allocation6 [shape = 's32[1]{0}', space=sflag, size = 0x4, scoped, tag = 'scoped memory for tpu_custom_call.1']
    #allocation7 [shape = 'u8[32768]{0}', space=vmem, size = 0x8000, scoped, tag = 'input window, operand 3, single buffered']
    #allocation8 [shape = 'u8[32768]{0}', space=vmem, size = 0x8000, scoped, tag = 'input window, operand 5, single buffered']
    #allocation9 [shape = 's32[1]{0}', space=sflag, size = 0x4, scoped, tag = 'scoped memory for tpu_custom_call.1']
    #allocation10 [shape = 'u8[32768]{0}', space=vmem, size = 0x8000, scoped, tag = 'input window, operand 7, single buffered']
    #allocation11 [shape = 'u8[512]{0}', space=vmem, size = 0x400, scoped, tag = 'output window, operand 0, single buffered']
    %15 = vsyncpa [#allocation3], 0
    %16 = vsyncpa [#allocation6], 0
    %17 = vsyncpa [#allocation9], 0
    %18 = vsyncpa [#allocation4], 0
    // Predicated region
    $region2: #{tpu_custom_call.1} parent=1 // pred_check
      _
    $region3: #{tpu_custom_call.1} parent=1 // pred_check_branch
      %20 = sbr.rel (0) target = $region5
    $region4: #{tpu_custom_call.1} parent=1 // pred_region
      %s22 = ssub.s32 16384, 256
      %23 = vsyncadd [#allocation3], %s22
      %s24 = sshll.u32 [#allocation2], 4
      %s25 = int_to_ptr.vmem [resolvable:$true] %s24
      %30 = dma.hbm_to_vmem [thread:$0]  %s0, 256, %s25, [#allocation3], 256, 256, 16
    $region5: #{tpu_custom_call.1} parent=1 // pred_fallthru
      _
    // Predicated region
    $region6: #{tpu_custom_call.1} parent=1 // pred_check
      _
    $region7: #{tpu_custom_call.1} parent=1 // pred_check_branch
      %32 = sbr.rel (0) target = $region9
    $region8: #{tpu_custom_call.1} parent=1 // pred_region
      %s34 = ssub.s32 8192, 8192
      %35 = vsyncadd [#allocation6], %s34
      %s36 = sshll.u32 [#allocation5], 4
      %s37 = int_to_ptr.vmem [resolvable:$true] %s36
      %42 = dma.hbm_to_vmem [thread:$0]  %s1, 8192, %s37, [#allocation6], 64, 64, 4
    $region9: #{tpu_custom_call.1} parent=1 // pred_fallthru
      _
    // Predicated region
    $region10: #{tpu_custom_call.1} parent=1 // pred_check
      _
    $region11: #{tpu_custom_call.1} parent=1 // pred_check_branch
      %44 = sbr.rel (0) target = $region13
    $region12: #{tpu_custom_call.1} parent=1 // pred_region
      _
    $region13: #{tpu_custom_call.1} parent=1 // pred_fallthru
      _
    // Predicated region
    $region14: #{tpu_custom_call.1} parent=1 // pred_check
      _
    $region15: #{tpu_custom_call.1} parent=1 // pred_check_branch
      %46 = sbr.rel (0) target = $region17
    $region16: #{tpu_custom_call.1} parent=1 // pred_region
      %s48 = ssub.s32 1024, 1024
      %49 = vsyncadd [#allocation6], %s48
      %s50 = sshll.u32 [#allocation7], 4
      %s51 = int_to_ptr.vmem [resolvable:$true] %s50
      %56 = dma.hbm_to_vmem [thread:$0]  %s3, 1024, %s51, [#allocation6], 64, 64, 4
    $region17: #{tpu_custom_call.1} parent=1 // pred_fallthru
      _
    // Predicated region
    $region18: #{tpu_custom_call.1} parent=1 // pred_check
      _
    $region19: #{tpu_custom_call.1} parent=1 // pred_check_branch
      %58 = sbr.rel (0) target = $region21
    $region20: #{tpu_custom_call.1} parent=1 // pred_region
      _
    $region21: #{tpu_custom_call.1} parent=1 // pred_fallthru
      _
    // Predicated region
    $region22: #{tpu_custom_call.1} parent=1 // pred_check
      _
    $region23: #{tpu_custom_call.1} parent=1 // pred_check_branch
      %60 = sbr.rel (0) target = $region25
    $region24: #{tpu_custom_call.1} parent=1 // pred_region
      %s62 = ssub.s32 1024, 1024
      %63 = vsyncadd [#allocation9], %s62
      %s64 = sshll.u32 [#allocation8], 4
      %s65 = int_to_ptr.vmem [resolvable:$true] %s64
      %70 = dma.hbm_to_vmem [thread:$0]  %s5, 1024, %s65, [#allocation9], 64, 64, 4
    $region25: #{tpu_custom_call.1} parent=1 // pred_fallthru
      _
    // Predicated region
    $region26: #{tpu_custom_call.1} parent=1 // pred_check
      _
    $region27: #{tpu_custom_call.1} parent=1 // pred_check_branch
      %72 = sbr.rel (0) target = $region29
    $region28: #{tpu_custom_call.1} parent=1 // pred_region
      _
    $region29: #{tpu_custom_call.1} parent=1 // pred_fallthru
      _
    // Predicated region
    $region30: #{tpu_custom_call.1} parent=1 // pred_check
      _
    $region31: #{tpu_custom_call.1} parent=1 // pred_check_branch
      %74 = sbr.rel (0) target = $region33
    $region32: #{tpu_custom_call.1} parent=1 // pred_region
      %s76 = ssub.s32 1024, 1024
      %77 = vsyncadd [#allocation9], %s76
      %s78 = sshll.u32 [#allocation10], 4
      %s79 = int_to_ptr.vmem [resolvable:$true] %s78
      %84 = dma.hbm_to_vmem [thread:$0]  %s7, 1024, %s79, [#allocation9], 64, 64, 4
    $region33: #{tpu_custom_call.1} parent=1 // pred_fallthru
      _
    // Predicated region
    $region34: #{tpu_custom_call.1} parent=1 // pred_check
      _
    $region35: #{tpu_custom_call.1} parent=1 // pred_check_branch
      %86 = sbr.rel (0) target = $region37
    $region36: #{tpu_custom_call.1} parent=1 // pred_region
      _
    $region37: #{tpu_custom_call.1} parent=1 // pred_fallthru
      _
    // Predicated region
    $region38: #{tpu_custom_call.1} parent=1 // pred_check
      _
    $region39: #{tpu_custom_call.1} parent=1 // pred_check_branch
      %88 = sbr.rel (0) target = $region41
    $region40: #{tpu_custom_call.1} parent=1 // pred_region
      _
    $region41: #{tpu_custom_call.1} parent=1 // pred_fallthru
      _
    // Predicated region
    $region42: #{tpu_custom_call.1} parent=1 // pred_check
      _
    $region43: #{tpu_custom_call.1} parent=1 // pred_check_branch
      %90 = sbr.rel (0) target = $region45
    $region44: #{tpu_custom_call.1} parent=1 // pred_region
      %91 = dma.done [#allocation3], 16384
    $region45: #{tpu_custom_call.1} parent=1 // pred_fallthru
      _
    // Predicated region
    $region46: #{tpu_custom_call.1} parent=1 // pred_check
      _
    $region47: #{tpu_custom_call.1} parent=1 // pred_check_branch
      %93 = sbr.rel (0) target = $region49
    $region48: #{tpu_custom_call.1} parent=1 // pred_region
      %94 = dma.done [#allocation6], 8192
    $region49: #{tpu_custom_call.1} parent=1 // pred_fallthru
      _
    // Predicated region
    $region50: #{tpu_custom_call.1} parent=1 // pred_check
      _
    $region51: #{tpu_custom_call.1} parent=1 // pred_check_branch
      %96 = sbr.rel (0) target = $region53
    $region52: #{tpu_custom_call.1} parent=1 // pred_region
      %97 = dma.done [#allocation6], 1024
    $region53: #{tpu_custom_call.1} parent=1 // pred_fallthru
      _
    // Predicated region
    $region54: #{tpu_custom_call.1} parent=1 // pred_check
      _
    $region55: #{tpu_custom_call.1} parent=1 // pred_check_branch
      %99 = sbr.rel (0) target = $region57
    $region56: #{tpu_custom_call.1} parent=1 // pred_region
      %100 = dma.done [#allocation9], 1024
    $region57: #{tpu_custom_call.1} parent=1 // pred_fallthru
      _
    // Predicated region
    $region58: #{tpu_custom_call.1} parent=1 // pred_check
      _
    $region59: #{tpu_custom_call.1} parent=1 // pred_check_branch
      %102 = sbr.rel (0) target = $region61
    $region60: #{tpu_custom_call.1} parent=1 // pred_region
      %103 = dma.done [#allocation9], 1024
    $region61: #{tpu_custom_call.1} parent=1 // pred_fallthru
      _
    %v105 = vld [vmem:[#allocation2] sm:$0xff]
    %v106 = vld [vmem:[#allocation2 + $0x8] sm:$0xff]
    %v107 = vld [vmem:[#allocation2 + $0x10] sm:$0xff]
    %v108 = vld [vmem:[#allocation2 + $0x18] sm:$0xff]
    %v109 = vld [vmem:[#allocation2 + $0x20] sm:$0xff]
    %v110 = vld [vmem:[#allocation2 + $0x28] sm:$0xff]
    %v111 = vld [vmem:[#allocation2 + $0x30] sm:$0xff]
    %v112 = vld [vmem:[#allocation2 + $0x38] sm:$0xff]
    %v113 = vld [vmem:[#allocation2 + $0x40] sm:$0xff]
    %v114 = vld [vmem:[#allocation2 + $0x48] sm:$0xff]
    %v115 = vld [vmem:[#allocation2 + $0x50] sm:$0xff]
    %v116 = vld [vmem:[#allocation2 + $0x58] sm:$0xff]
    %v117 = vld [vmem:[#allocation2 + $0x60] sm:$0xff]
    %v118 = vld [vmem:[#allocation2 + $0x68] sm:$0xff]
    %v119 = vld [vmem:[#allocation2 + $0x70] sm:$0xff]
    %v120 = vld [vmem:[#allocation2 + $0x78] sm:$0xff]
    %v121 = vld [vmem:[#allocation2 + $0x80] sm:$0xff]
    %v122 = vld [vmem:[#allocation2 + $0x88] sm:$0xff]
    %v123 = vld [vmem:[#allocation2 + $0x90] sm:$0xff]
    %v124 = vld [vmem:[#allocation2 + $0x98] sm:$0xff]
    %v125 = vld [vmem:[#allocation2 + $0xa0] sm:$0xff]
    %v126 = vld [vmem:[#allocation2 + $0xa8] sm:$0xff]
    %v127 = vld [vmem:[#allocation2 + $0xb0] sm:$0xff]
    %v128 = vld [vmem:[#allocation2 + $0xb8] sm:$0xff]
    %v129 = vld [vmem:[#allocation2 + $0xc0] sm:$0xff]
    %v130 = vld [vmem:[#allocation2 + $0xc8] sm:$0xff]
    %v131 = vld [vmem:[#allocation2 + $0xd0] sm:$0xff]
    %v132 = vld [vmem:[#allocation2 + $0xd8] sm:$0xff]
    %v133 = vld [vmem:[#allocation2 + $0xe0] sm:$0xff]
    %v134 = vld [vmem:[#allocation2 + $0xe8] sm:$0xff]
    %v135 = vld [vmem:[#allocation2 + $0xf0] sm:$0xff]
    %v136 = vld [vmem:[#allocation2 + $0xf8] sm:$0xff]
    %v137 = vld [vmem:[#allocation2 + $0x100] sm:$0xff]
    %v138 = vld [vmem:[#allocation2 + $0x108] sm:$0xff]
    %v139 = vld [vmem:[#allocation2 + $0x110] sm:$0xff]
    %v140 = vld [vmem:[#allocation2 + $0x118] sm:$0xff]
    %v141 = vld [vmem:[#allocation2 + $0x120] sm:$0xff]
    %v142 = vld [vmem:[#allocation2 + $0x128] sm:$0xff]
    %v143 = vld [vmem:[#allocation2 + $0x130] sm:$0xff]
    %v144 = vld [vmem:[#allocation2 + $0x138] sm:$0xff]
    %v145 = vld [vmem:[#allocation2 + $0x140] sm:$0xff]
    %v146 = vld [vmem:[#allocation2 + $0x148] sm:$0xff]
    %v147 = vld [vmem:[#allocation2 + $0x150] sm:$0xff]
    %v148 = vld [vmem:[#allocation2 + $0x158] sm:$0xff]
    %v149 = vld [vmem:[#allocation2 + $0x160] sm:$0xff]
    %v150 = vld [vmem:[#allocation2 + $0x168] sm:$0xff]
    %v151 = vld [vmem:[#allocation2 + $0x170] sm:$0xff]
    %v152 = vld [vmem:[#allocation2 + $0x178] sm:$0xff]
    %v153 = vld [vmem:[#allocation2 + $0x180] sm:$0xff]
    %v154 = vld [vmem:[#allocation2 + $0x188] sm:$0xff]
    %v155 = vld [vmem:[#allocation2 + $0x190] sm:$0xff]
    %v156 = vld [vmem:[#allocation2 + $0x198] sm:$0xff]
    %v157 = vld [vmem:[#allocation2 + $0x1a0] sm:$0xff]
    %v158 = vld [vmem:[#allocation2 + $0x1a8] sm:$0xff]
    %v159 = vld [vmem:[#allocation2 + $0x1b0] sm:$0xff]
    %v160 = vld [vmem:[#allocation2 + $0x1b8] sm:$0xff]
    %v161 = vld [vmem:[#allocation2 + $0x1c0] sm:$0xff]
    %v162 = vld [vmem:[#allocation2 + $0x1c8] sm:$0xff]
    %v163 = vld [vmem:[#allocation2 + $0x1d0] sm:$0xff]
    %v164 = vld [vmem:[#allocation2 + $0x1d8] sm:$0xff]
    %v165 = vld [vmem:[#allocation2 + $0x1e0] sm:$0xff]
    %v166 = vld [vmem:[#allocation2 + $0x1e8] sm:$0xff]
    %v167 = vld [vmem:[#allocation2 + $0x1f0] sm:$0xff]
    %v168 = vld [vmem:[#allocation2 + $0x1f8] sm:$0xff]
    %v169 = vld [vmem:[#allocation2 + $0x200] sm:$0xff]
    %v170 = vld [vmem:[#allocation2 + $0x208] sm:$0xff]
    %v171 = vld [vmem:[#allocation2 + $0x210] sm:$0xff]
    %v172 = vld [vmem:[#allocation2 + $0x218] sm:$0xff]
    %v173 = vld [vmem:[#allocation2 + $0x220] sm:$0xff]
    %v174 = vld [vmem:[#allocation2 + $0x228] sm:$0xff]
    %v175 = vld [vmem:[#allocation2 + $0x230] sm:$0xff]
    %v176 = vld [vmem:[#allocation2 + $0x238] sm:$0xff]
    %v177 = vld [vmem:[#allocation2 + $0x240] sm:$0xff]
    %v178 = vld [vmem:[#allocation2 + $0x248] sm:$0xff]
    %v179 = vld [vmem:[#allocation2 + $0x250] sm:$0xff]
    %v180 = vld [vmem:[#allocation2 + $0x258] sm:$0xff]
    %v181 = vld [vmem:[#allocation2 + $0x260] sm:$0xff]
    %v182 = vld [vmem:[#allocation2 + $0x268] sm:$0xff]
    %v183 = vld [vmem:[#allocation2 + $0x270] sm:$0xff]
    %v184 = vld [vmem:[#allocation2 + $0x278] sm:$0xff]
    %v185 = vld [vmem:[#allocation2 + $0x280] sm:$0xff]
    %v186 = vld [vmem:[#allocation2 + $0x288] sm:$0xff]
    %v187 = vld [vmem:[#allocation2 + $0x290] sm:$0xff]
    %v188 = vld [vmem:[#allocation2 + $0x298] sm:$0xff]
    %v189 = vld [vmem:[#allocation2 + $0x2a0] sm:$0xff]
    %v190 = vld [vmem:[#allocation2 + $0x2a8] sm:$0xff]
    %v191 = vld [vmem:[#allocation2 + $0x2b0] sm:$0xff]
    %v192 = vld [vmem:[#allocation2 + $0x2b8] sm:$0xff]
    %v193 = vld [vmem:[#allocation2 + $0x2c0] sm:$0xff]
    %v194 = vld [vmem:[#allocation2 + $0x2c8] sm:$0xff]
    %v195 = vld [vmem:[#allocation2 + $0x2d0] sm:$0xff]
    %v196 = vld [vmem:[#allocation2 + $0x2d8] sm:$0xff]
    %v197 = vld [vmem:[#allocation2 + $0x2e0] sm:$0xff]
    %v198 = vld [vmem:[#allocation2 + $0x2e8] sm:$0xff]
    %v199 = vld [vmem:[#allocation2 + $0x2f0] sm:$0xff]
    %v200 = vld [vmem:[#allocation2 + $0x2f8] sm:$0xff]
    %v201 = vld [vmem:[#allocation2 + $0x300] sm:$0xff]
    %v202 = vld [vmem:[#allocation2 + $0x308] sm:$0xff]
    %v203 = vld [vmem:[#allocation2 + $0x310] sm:$0xff]
    %v204 = vld [vmem:[#allocation2 + $0x318] sm:$0xff]
    %v205 = vld [vmem:[#allocation2 + $0x320] sm:$0xff]
    %v206 = vld [vmem:[#allocation2 + $0x328] sm:$0xff]
    %v207 = vld [vmem:[#allocation2 + $0x330] sm:$0xff]
    %v208 = vld [vmem:[#allocation2 + $0x338] sm:$0xff]
    %v209 = vld [vmem:[#allocation2 + $0x340] sm:$0xff]
    %v210 = vld [vmem:[#allocation2 + $0x348] sm:$0xff]
    %v211 = vld [vmem:[#allocation2 + $0x350] sm:$0xff]
    %v212 = vld [vmem:[#allocation2 + $0x358] sm:$0xff]
    %v213 = vld [vmem:[#allocation2 + $0x360] sm:$0xff]
    %v214 = vld [vmem:[#allocation2 + $0x368] sm:$0xff]
    %v215 = vld [vmem:[#allocation2 + $0x370] sm:$0xff]
    %v216 = vld [vmem:[#allocation2 + $0x378] sm:$0xff]
    %v217 = vld [vmem:[#allocation2 + $0x380] sm:$0xff]
    %v218 = vld [vmem:[#allocation2 + $0x388] sm:$0xff]
    %v219 = vld [vmem:[#allocation2 + $0x390] sm:$0xff]
    %v220 = vld [vmem:[#allocation2 + $0x398] sm:$0xff]
    %v221 = vld [vmem:[#allocation2 + $0x3a0] sm:$0xff]
    %v222 = vld [vmem:[#allocation2 + $0x3a8] sm:$0xff]
    %v223 = vld [vmem:[#allocation2 + $0x3b0] sm:$0xff]
    %v224 = vld [vmem:[#allocation2 + $0x3b8] sm:$0xff]
    %v225 = vld [vmem:[#allocation2 + $0x3c0] sm:$0xff]
    %v226 = vld [vmem:[#allocation2 + $0x3c8] sm:$0xff]
    %v227 = vld [vmem:[#allocation2 + $0x3d0] sm:$0xff]
    %v228 = vld [vmem:[#allocation2 + $0x3d8] sm:$0xff]
    %v229 = vld [vmem:[#allocation2 + $0x3e0] sm:$0xff]
    %v230 = vld [vmem:[#allocation2 + $0x3e8] sm:$0xff]
    %v231 = vld [vmem:[#allocation2 + $0x3f0] sm:$0xff]
    %v232 = vld [vmem:[#allocation2 + $0x3f8] sm:$0xff]
    %v361 = vcombine.low %v105, %v107
    %v362 = vcombine.high %v105, %v107
    %v363 = vcombine.low %v109, %v111
    %v364 = vcombine.high %v109, %v111
    %v366 = vunpack.c.l.s4 1983009808
    %v367 = vunpack.c.0.s8 %v366
    %v368 = vlaneseq
    %v369 = vshrl.u32 %v368, 7
    %v370 = vsub.s32 %v367, %v369
    %v371 = vrot.slane %v361, %v370
    %v373 = vunpack.c.l.s4 1983009808
    %v374 = vunpack.c.0.s8 %v373
    %v375 = vlaneseq
    %v376 = vshrl.u32 %v375, 7
    %v377 = vsub.s32 %v374, %v376
    %v378 = vrot.slane %v362, %v377
    %v380 = vunpack.c.l.s4 1983009808
    %v381 = vunpack.c.0.s8 %v380
    %v382 = vlaneseq
    %v383 = vshrl.u32 %v382, 7
    %v384 = vsub.s32 %v381, %v383
    %v385 = vrot.slane %v363, %v384
    %v387 = vunpack.c.l.s4 1983009808
    %v388 = vunpack.c.0.s8 %v387
    %v389 = vlaneseq
    %v390 = vshrl.u32 %v389, 7
    %v391 = vsub.s32 %v388, %v390
    %v392 = vrot.slane %v364, %v391
    %v393 = vcombine.low %v371, %v385
    %v394 = vcombine.high %v371, %v385
    %v395 = vcombine.low %v378, %v392
    %v396 = vcombine.high %v378, %v392
    %v397 = vcombine.low %v106, %v108
    %v398 = vcombine.high %v106, %v108
    %v399 = vcombine.low %v110, %v112
    %v400 = vcombine.high %v110, %v112
    %v402 = vunpack.c.l.s4 1983009808
    %v403 = vunpack.c.0.s8 %v402
    %v404 = vlaneseq
    %v405 = vshrl.u32 %v404, 7
    %v406 = vsub.s32 %v403, %v405
    %v407 = vrot.slane %v397, %v406
    %v409 = vunpack.c.l.s4 1983009808
    %v410 = vunpack.c.0.s8 %v409
    %v411 = vlaneseq
    %v412 = vshrl.u32 %v411, 7
    %v413 = vsub.s32 %v410, %v412
    %v414 = vrot.slane %v398, %v413
    %v416 = vunpack.c.l.s4 1983009808
    %v417 = vunpack.c.0.s8 %v416
    %v418 = vlaneseq
    %v419 = vshrl.u32 %v418, 7
    %v420 = vsub.s32 %v417, %v419
    %v421 = vrot.slane %v399, %v420
    %v423 = vunpack.c.l.s4 1983009808
    %v424 = vunpack.c.0.s8 %v423
    %v425 = vlaneseq
    %v426 = vshrl.u32 %v425, 7
    %v427 = vsub.s32 %v424, %v426
    %v428 = vrot.slane %v400, %v427
    %v429 = vcombine.low %v407, %v421
    %v430 = vcombine.high %v407, %v421
    %v431 = vcombine.low %v414, %v428
    %v432 = vcombine.high %v414, %v428
    %v433 = vcombine.low %v113, %v115
    %v434 = vcombine.high %v113, %v115
    %v435 = vcombine.low %v117, %v119
    %v436 = vcombine.high %v117, %v119
    %v438 = vunpack.c.l.s4 1983009808
    %v439 = vunpack.c.0.s8 %v438
    %v440 = vlaneseq
    %v441 = vshrl.u32 %v440, 7
    %v442 = vsub.s32 %v439, %v441
    %v443 = vrot.slane %v433, %v442
    %v445 = vunpack.c.l.s4 1983009808
    %v446 = vunpack.c.0.s8 %v445
    %v447 = vlaneseq
    %v448 = vshrl.u32 %v447, 7
    %v449 = vsub.s32 %v446, %v448
    %v450 = vrot.slane %v434, %v449
    %v452 = vunpack.c.l.s4 1983009808
    %v453 = vunpack.c.0.s8 %v452
    %v454 = vlaneseq
    %v455 = vshrl.u32 %v454, 7
    %v456 = vsub.s32 %v453, %v455
    %v457 = vrot.slane %v435, %v456
    %v459 = vunpack.c.l.s4 1983009808
    %v460 = vunpack.c.0.s8 %v459
    %v461 = vlaneseq
    %v462 = vshrl.u32 %v461, 7
    %v463 = vsub.s32 %v460, %v462
    %v464 = vrot.slane %v436, %v463
    %v465 = vcombine.low %v443, %v457
    %v466 = vcombine.high %v443, %v457
    %v467 = vcombine.low %v450, %v464
    %v468 = vcombine.high %v450, %v464
    %v469 = vcombine.low %v114, %v116
    %v470 = vcombine.high %v114, %v116
    %v471 = vcombine.low %v118, %v120
    %v472 = vcombine.high %v118, %v120
    %v474 = vunpack.c.l.s4 1983009808
    %v475 = vunpack.c.0.s8 %v474
    %v476 = vlaneseq
    %v477 = vshrl.u32 %v476, 7
    %v478 = vsub.s32 %v475, %v477
    %v479 = vrot.slane %v469, %v478
    %v481 = vunpack.c.l.s4 1983009808
    %v482 = vunpack.c.0.s8 %v481
    %v483 = vlaneseq
    %v484 = vshrl.u32 %v483, 7
    %v485 = vsub.s32 %v482, %v484
    %v486 = vrot.slane %v470, %v485
    %v488 = vunpack.c.l.s4 1983009808
    %v489 = vunpack.c.0.s8 %v488
    %v490 = vlaneseq
    %v491 = vshrl.u32 %v490, 7
    %v492 = vsub.s32 %v489, %v491
    %v493 = vrot.slane %v471, %v492
    %v495 = vunpack.c.l.s4 1983009808
    %v496 = vunpack.c.0.s8 %v495
    %v497 = vlaneseq
    %v498 = vshrl.u32 %v497, 7
    %v499 = vsub.s32 %v496, %v498
    %v500 = vrot.slane %v472, %v499
    %v501 = vcombine.low %v479, %v493
    %v502 = vcombine.high %v479, %v493
    %v503 = vcombine.low %v486, %v500
    %v504 = vcombine.high %v486, %v500
    %v505 = vcombine.low %v121, %v123
    %v506 = vcombine.high %v121, %v123
    %v507 = vcombine.low %v125, %v127
    %v508 = vcombine.high %v125, %v127
    %v510 = vunpack.c.l.s4 1983009808
    %v511 = vunpack.c.0.s8 %v510
    %v512 = vlaneseq
    %v513 = vshrl.u32 %v512, 7
    %v514 = vsub.s32 %v511, %v513
    %v515 = vrot.slane %v505, %v514
    %v517 = vunpack.c.l.s4 1983009808
    %v518 = vunpack.c.0.s8 %v517
    %v519 = vlaneseq
    %v520 = vshrl.u32 %v519, 7
    %v521 = vsub.s32 %v518, %v520
    %v522 = vrot.slane %v506, %v521
    %v524 = vunpack.c.l.s4 1983009808
    %v525 = vunpack.c.0.s8 %v524
    %v526 = vlaneseq
    %v527 = vshrl.u32 %v526, 7
    %v528 = vsub.s32 %v525, %v527
    %v529 = vrot.slane %v507, %v528
    %v531 = vunpack.c.l.s4 1983009808
    %v532 = vunpack.c.0.s8 %v531
    %v533 = vlaneseq
    %v534 = vshrl.u32 %v533, 7
    %v535 = vsub.s32 %v532, %v534
    %v536 = vrot.slane %v508, %v535
    %v537 = vcombine.low %v515, %v529
    %v538 = vcombine.high %v515, %v529
    %v539 = vcombine.low %v522, %v536
    %v540 = vcombine.high %v522, %v536
    %v541 = vcombine.low %v122, %v124
    %v542 = vcombine.high %v122, %v124
    %v543 = vcombine.low %v126, %v128
    %v544 = vcombine.high %v126, %v128
    %v546 = vunpack.c.l.s4 1983009808
    %v547 = vunpack.c.0.s8 %v546
    %v548 = vlaneseq
    %v549 = vshrl.u32 %v548, 7
    %v550 = vsub.s32 %v547, %v549
    %v551 = vrot.slane %v541, %v550
    %v553 = vunpack.c.l.s4 1983009808
    %v554 = vunpack.c.0.s8 %v553
    %v555 = vlaneseq
    %v556 = vshrl.u32 %v555, 7
    %v557 = vsub.s32 %v554, %v556
    %v558 = vrot.slane %v542, %v557
    %v560 = vunpack.c.l.s4 1983009808
    %v561 = vunpack.c.0.s8 %v560
    %v562 = vlaneseq
    %v563 = vshrl.u32 %v562, 7
    %v564 = vsub.s32 %v561, %v563
    %v565 = vrot.slane %v543, %v564
    %v567 = vunpack.c.l.s4 1983009808
    %v568 = vunpack.c.0.s8 %v567
    %v569 = vlaneseq
    %v570 = vshrl.u32 %v569, 7
    %v571 = vsub.s32 %v568, %v570
    %v572 = vrot.slane %v544, %v571
    %v573 = vcombine.low %v551, %v565
    %v574 = vcombine.high %v551, %v565
    %v575 = vcombine.low %v558, %v572
    %v576 = vcombine.high %v558, %v572
    %v577 = vcombine.low %v129, %v131
    %v578 = vcombine.high %v129, %v131
    %v579 = vcombine.low %v133, %v135
    %v580 = vcombine.high %v133, %v135
    %v582 = vunpack.c.l.s4 1983009808
    %v583 = vunpack.c.0.s8 %v582
    %v584 = vlaneseq
    %v585 = vshrl.u32 %v584, 7
    %v586 = vsub.s32 %v583, %v585
    %v587 = vrot.slane %v577, %v586
    %v589 = vunpack.c.l.s4 1983009808
    %v590 = vunpack.c.0.s8 %v589
    %v591 = vlaneseq
    %v592 = vshrl.u32 %v591, 7
    %v593 = vsub.s32 %v590, %v592
    %v594 = vrot.slane %v578, %v593
    %v596 = vunpack.c.l.s4 1983009808
    %v597 = vunpack.c.0.s8 %v596
    %v598 = vlaneseq
    %v599 = vshrl.u32 %v598, 7
    %v600 = vsub.s32 %v597, %v599
    %v601 = vrot.slane %v579, %v600
    %v603 = vunpack.c.l.s4 1983009808
    %v604 = vunpack.c.0.s8 %v603
    %v605 = vlaneseq
    %v606 = vshrl.u32 %v605, 7
    %v607 = vsub.s32 %v604, %v606
    %v608 = vrot.slane %v580, %v607
    %v609 = vcombine.low %v587, %v601
    %v610 = vcombine.high %v587, %v601
    %v611 = vcombine.low %v594, %v608
    %v612 = vcombine.high %v594, %v608
    %v613 = vcombine.low %v130, %v132
    %v614 = vcombine.high %v130, %v132
    %v615 = vcombine.low %v134, %v136
    %v616 = vcombine.high %v134, %v136
    %v618 = vunpack.c.l.s4 1983009808
    %v619 = vunpack.c.0.s8 %v618
    %v620 = vlaneseq
    %v621 = vshrl.u32 %v620, 7
    %v622 = vsub.s32 %v619, %v621
    %v623 = vrot.slane %v613, %v622
    %v625 = vunpack.c.l.s4 1983009808
    %v626 = vunpack.c.0.s8 %v625
    %v627 = vlaneseq
    %v628 = vshrl.u32 %v627, 7
    %v629 = vsub.s32 %v626, %v628
    %v630 = vrot.slane %v614, %v629
    %v632 = vunpack.c.l.s4 1983009808
    %v633 = vunpack.c.0.s8 %v632
    %v634 = vlaneseq
    %v635 = vshrl.u32 %v634, 7
    %v636 = vsub.s32 %v633, %v635
    %v637 = vrot.slane %v615, %v636
    %v639 = vunpack.c.l.s4 1983009808
    %v640 = vunpack.c.0.s8 %v639
    %v641 = vlaneseq
    %v642 = vshrl.u32 %v641, 7
    %v643 = vsub.s32 %v640, %v642
    %v644 = vrot.slane %v616, %v643
    %v645 = vcombine.low %v623, %v637
    %v646 = vcombine.high %v623, %v637
    %v647 = vcombine.low %v630, %v644
    %v648 = vcombine.high %v630, %v644
    %v649 = vcombine.low %v137, %v139
    %v650 = vcombine.high %v137, %v139
    %v651 = vcombine.low %v141, %v143
    %v652 = vcombine.high %v141, %v143
    %v654 = vunpack.c.l.s4 1983009808
    %v655 = vunpack.c.0.s8 %v654
    %v656 = vlaneseq
    %v657 = vshrl.u32 %v656, 7
    %v658 = vsub.s32 %v655, %v657
    %v659 = vrot.slane %v649, %v658
    %v661 = vunpack.c.l.s4 1983009808
    %v662 = vunpack.c.0.s8 %v661
    %v663 = vlaneseq
    %v664 = vshrl.u32 %v663, 7
    %v665 = vsub.s32 %v662, %v664
    %v666 = vrot.slane %v650, %v665
    %v668 = vunpack.c.l.s4 1983009808
    %v669 = vunpack.c.0.s8 %v668
    %v670 = vlaneseq
    %v671 = vshrl.u32 %v670, 7
    %v672 = vsub.s32 %v669, %v671
    %v673 = vrot.slane %v651, %v672
    %v675 = vunpack.c.l.s4 1983009808
    %v676 = vunpack.c.0.s8 %v675
    %v677 = vlaneseq
    %v678 = vshrl.u32 %v677, 7
    %v679 = vsub.s32 %v676, %v678
    %v680 = vrot.slane %v652, %v679
    %v681 = vcombine.low %v659, %v673
    %v682 = vcombine.high %v659, %v673
    %v683 = vcombine.low %v666, %v680
    %v684 = vcombine.high %v666, %v680
    %v685 = vcombine.low %v138, %v140
    %v686 = vcombine.high %v138, %v140
    %v687 = vcombine.low %v142, %v144
    %v688 = vcombine.high %v142, %v144
    %v690 = vunpack.c.l.s4 1983009808
    %v691 = vunpack.c.0.s8 %v690
    %v692 = vlaneseq
    %v693 = vshrl.u32 %v692, 7
    %v694 = vsub.s32 %v691, %v693
    %v695 = vrot.slane %v685, %v694
    %v697 = vunpack.c.l.s4 1983009808
    %v698 = vunpack.c.0.s8 %v697
    %v699 = vlaneseq
    %v700 = vshrl.u32 %v699, 7
    %v701 = vsub.s32 %v698, %v700
    %v702 = vrot.slane %v686, %v701
    %v704 = vunpack.c.l.s4 1983009808
    %v705 = vunpack.c.0.s8 %v704
    %v706 = vlaneseq
    %v707 = vshrl.u32 %v706, 7
    %v708 = vsub.s32 %v705, %v707
    %v709 = vrot.slane %v687, %v708
    %v711 = vunpack.c.l.s4 1983009808
    %v712 = vunpack.c.0.s8 %v711
    %v713 = vlaneseq
    %v714 = vshrl.u32 %v713, 7
    %v715 = vsub.s32 %v712, %v714
    %v716 = vrot.slane %v688, %v715
    %v717 = vcombine.low %v695, %v709
    %v718 = vcombine.high %v695, %v709
    %v719 = vcombine.low %v702, %v716
    %v720 = vcombine.high %v702, %v716
    %v721 = vcombine.low %v145, %v147
    %v722 = vcombine.high %v145, %v147
    %v723 = vcombine.low %v149, %v151
    %v724 = vcombine.high %v149, %v151
    %v726 = vunpack.c.l.s4 1983009808
    %v727 = vunpack.c.0.s8 %v726
    %v728 = vlaneseq
    %v729 = vshrl.u32 %v728, 7
    %v730 = vsub.s32 %v727, %v729
    %v731 = vrot.slane %v721, %v730
    %v733 = vunpack.c.l.s4 1983009808
    %v734 = vunpack.c.0.s8 %v733
    %v735 = vlaneseq
    %v736 = vshrl.u32 %v735, 7
    %v737 = vsub.s32 %v734, %v736
    %v738 = vrot.slane %v722, %v737
    %v740 = vunpack.c.l.s4 1983009808
    %v741 = vunpack.c.0.s8 %v740
    %v742 = vlaneseq
    %v743 = vshrl.u32 %v742, 7
    %v744 = vsub.s32 %v741, %v743
    %v745 = vrot.slane %v723, %v744
    %v747 = vunpack.c.l.s4 1983009808
    %v748 = vunpack.c.0.s8 %v747
    %v749 = vlaneseq
    %v750 = vshrl.u32 %v749, 7
    %v751 = vsub.s32 %v748, %v750
    %v752 = vrot.slane %v724, %v751
    %v753 = vcombine.low %v731, %v745
    %v754 = vcombine.high %v731, %v745
    %v755 = vcombine.low %v738, %v752
    %v756 = vcombine.high %v738, %v752
    %v757 = vcombine.low %v146, %v148
    %v758 = vcombine.high %v146, %v148
    %v759 = vcombine.low %v150, %v152
    %v760 = vcombine.high %v150, %v152
    %v762 = vunpack.c.l.s4 1983009808
    %v763 = vunpack.c.0.s8 %v762
    %v764 = vlaneseq
    %v765 = vshrl.u32 %v764, 7
    %v766 = vsub.s32 %v763, %v765
    %v767 = vrot.slane %v757, %v766
    %v769 = vunpack.c.l.s4 1983009808
    %v770 = vunpack.c.0.s8 %v769
    %v771 = vlaneseq
    %v772 = vshrl.u32 %v771, 7
    %v773 = vsub.s32 %v770, %v772
    %v774 = vrot.slane %v758, %v773
    %v776 = vunpack.c.l.s4 1983009808
    %v777 = vunpack.c.0.s8 %v776
    %v778 = vlaneseq
    %v779 = vshrl.u32 %v778, 7
    %v780 = vsub.s32 %v777, %v779
    %v781 = vrot.slane %v759, %v780
    %v783 = vunpack.c.l.s4 1983009808
    %v784 = vunpack.c.0.s8 %v783
    %v785 = vlaneseq
    %v786 = vshrl.u32 %v785, 7
    %v787 = vsub.s32 %v784, %v786
    %v788 = vrot.slane %v760, %v787
    %v789 = vcombine.low %v767, %v781
    %v790 = vcombine.high %v767, %v781
    %v791 = vcombine.low %v774, %v788
    %v792 = vcombine.high %v774, %v788
    %v793 = vcombine.low %v153, %v155
    %v794 = vcombine.high %v153, %v155
    %v795 = vcombine.low %v157, %v159
    %v796 = vcombine.high %v157, %v159
    %v798 = vunpack.c.l.s4 1983009808
    %v799 = vunpack.c.0.s8 %v798
    %v800 = vlaneseq
    %v801 = vshrl.u32 %v800, 7
    %v802 = vsub.s32 %v799, %v801
    %v803 = vrot.slane %v793, %v802
    %v805 = vunpack.c.l.s4 1983009808
    %v806 = vunpack.c.0.s8 %v805
    %v807 = vlaneseq
    %v808 = vshrl.u32 %v807, 7
    %v809 = vsub.s32 %v806, %v808
    %v810 = vrot.slane %v794, %v809
    %v812 = vunpack.c.l.s4 1983009808
    %v813 = vunpack.c.0.s8 %v812
    %v814 = vlaneseq
    %v815 = vshrl.u32 %v814, 7
    %v816 = vsub.s32 %v813, %v815
    %v817 = vrot.slane %v795, %v816
    %v819 = vunpack.c.l.s4 1983009808
    %v820 = vunpack.c.0.s8 %v819
    %v821 = vlaneseq
    %v822 = vshrl.u32 %v821, 7
    %v823 = vsub.s32 %v820, %v822
    %v824 = vrot.slane %v796, %v823
    %v825 = vcombine.low %v803, %v817
    %v826 = vcombine.high %v803, %v817
    %v827 = vcombine.low %v810, %v824
    %v828 = vcombine.high %v810, %v824
    %v829 = vcombine.low %v154, %v156
    %v830 = vcombine.high %v154, %v156
    %v831 = vcombine.low %v158, %v160
    %v832 = vcombine.high %v158, %v160
    %v834 = vunpack.c.l.s4 1983009808
    %v835 = vunpack.c.0.s8 %v834
    %v836 = vlaneseq
    %v837 = vshrl.u32 %v836, 7
    %v838 = vsub.s32 %v835, %v837
    %v839 = vrot.slane %v829, %v838
    %v841 = vunpack.c.l.s4 1983009808
    %v842 = vunpack.c.0.s8 %v841
    %v843 = vlaneseq
    %v844 = vshrl.u32 %v843, 7
    %v845 = vsub.s32 %v842, %v844
    %v846 = vrot.slane %v830, %v845
    %v848 = vunpack.c.l.s4 1983009808
    %v849 = vunpack.c.0.s8 %v848
    %v850 = vlaneseq
    %v851 = vshrl.u32 %v850, 7
    %v852 = vsub.s32 %v849, %v851
    %v853 = vrot.slane %v831, %v852
    %v855 = vunpack.c.l.s4 1983009808
    %v856 = vunpack.c.0.s8 %v855
    %v857 = vlaneseq
    %v858 = vshrl.u32 %v857, 7
    %v859 = vsub.s32 %v856, %v858
    %v860 = vrot.slane %v832, %v859
    %v861 = vcombine.low %v839, %v853
    %v862 = vcombine.high %v839, %v853
    %v863 = vcombine.low %v846, %v860
    %v864 = vcombine.high %v846, %v860
    %v865 = vcombine.low %v161, %v163
    %v866 = vcombine.high %v161, %v163
    %v867 = vcombine.low %v165, %v167
    %v868 = vcombine.high %v165, %v167
    %v870 = vunpack.c.l.s4 1983009808
    %v871 = vunpack.c.0.s8 %v870
    %v872 = vlaneseq
    %v873 = vshrl.u32 %v872, 7
    %v874 = vsub.s32 %v871, %v873
    %v875 = vrot.slane %v865, %v874
    %v877 = vunpack.c.l.s4 1983009808
    %v878 = vunpack.c.0.s8 %v877
    %v879 = vlaneseq
    %v880 = vshrl.u32 %v879, 7
    %v881 = vsub.s32 %v878, %v880
    %v882 = vrot.slane %v866, %v881
    %v884 = vunpack.c.l.s4 1983009808
    %v885 = vunpack.c.0.s8 %v884
    %v886 = vlaneseq
    %v887 = vshrl.u32 %v886, 7
    %v888 = vsub.s32 %v885, %v887
    %v889 = vrot.slane %v867, %v888
    %v891 = vunpack.c.l.s4 1983009808
    %v892 = vunpack.c.0.s8 %v891
    %v893 = vlaneseq
    %v894 = vshrl.u32 %v893, 7
    %v895 = vsub.s32 %v892, %v894
    %v896 = vrot.slane %v868, %v895
    %v897 = vcombine.low %v875, %v889
    %v898 = vcombine.high %v875, %v889
    %v899 = vcombine.low %v882, %v896
    %v900 = vcombine.high %v882, %v896
    %v901 = vcombine.low %v162, %v164
    %v902 = vcombine.high %v162, %v164
    %v903 = vcombine.low %v166, %v168
    %v904 = vcombine.high %v166, %v168
    %v906 = vunpack.c.l.s4 1983009808
    %v907 = vunpack.c.0.s8 %v906
    %v908 = vlaneseq
    %v909 = vshrl.u32 %v908, 7
    %v910 = vsub.s32 %v907, %v909
    %v911 = vrot.slane %v901, %v910
    %v913 = vunpack.c.l.s4 1983009808
    %v914 = vunpack.c.0.s8 %v913
    %v915 = vlaneseq
    %v916 = vshrl.u32 %v915, 7
    %v917 = vsub.s32 %v914, %v916
    %v918 = vrot.slane %v902, %v917
    %v920 = vunpack.c.l.s4 1983009808
    %v921 = vunpack.c.0.s8 %v920
    %v922 = vlaneseq
    %v923 = vshrl.u32 %v922, 7
    %v924 = vsub.s32 %v921, %v923
    %v925 = vrot.slane %v903, %v924
    %v927 = vunpack.c.l.s4 1983009808
    %v928 = vunpack.c.0.s8 %v927
    %v929 = vlaneseq
    %v930 = vshrl.u32 %v929, 7
    %v931 = vsub.s32 %v928, %v930
    %v932 = vrot.slane %v904, %v931
    %v933 = vcombine.low %v911, %v925
    %v934 = vcombine.high %v911, %v925
    %v935 = vcombine.low %v918, %v932
    %v936 = vcombine.high %v918, %v932
    %v937 = vcombine.low %v169, %v171
    %v938 = vcombine.high %v169, %v171
    %v939 = vcombine.low %v173, %v175
    %v940 = vcombine.high %v173, %v175
    %v942 = vunpack.c.l.s4 1983009808
    %v943 = vunpack.c.0.s8 %v942
    %v944 = vlaneseq
    %v945 = vshrl.u32 %v944, 7
    %v946 = vsub.s32 %v943, %v945
    %v947 = vrot.slane %v937, %v946
    %v949 = vunpack.c.l.s4 1983009808
    %v950 = vunpack.c.0.s8 %v949
    %v951 = vlaneseq
    %v952 = vshrl.u32 %v951, 7
    %v953 = vsub.s32 %v950, %v952
    %v954 = vrot.slane %v938, %v953
    %v956 = vunpack.c.l.s4 1983009808
    %v957 = vunpack.c.0.s8 %v956
    %v958 = vlaneseq
    %v959 = vshrl.u32 %v958, 7
    %v960 = vsub.s32 %v957, %v959
    %v961 = vrot.slane %v939, %v960
    %v963 = vunpack.c.l.s4 1983009808
    %v964 = vunpack.c.0.s8 %v963
    %v965 = vlaneseq
    %v966 = vshrl.u32 %v965, 7
    %v967 = vsub.s32 %v964, %v966
    %v968 = vrot.slane %v940, %v967
    %v969 = vcombine.low %v947, %v961
    %v970 = vcombine.high %v947, %v961
    %v971 = vcombine.low %v954, %v968
    %v972 = vcombine.high %v954, %v968
    %v973 = vcombine.low %v170, %v172
    %v974 = vcombine.high %v170, %v172
    %v975 = vcombine.low %v174, %v176
    %v976 = vcombine.high %v174, %v176
    %v978 = vunpack.c.l.s4 1983009808
    %v979 = vunpack.c.0.s8 %v978
    %v980 = vlaneseq
    %v981 = vshrl.u32 %v980, 7
    %v982 = vsub.s32 %v979, %v981
    %v983 = vrot.slane %v973, %v982
    %v985 = vunpack.c.l.s4 1983009808
    %v986 = vunpack.c.0.s8 %v985
    %v987 = vlaneseq
    %v988 = vshrl.u32 %v987, 7
    %v989 = vsub.s32 %v986, %v988
    %v990 = vrot.slane %v974, %v989
    %v992 = vunpack.c.l.s4 1983009808
    %v993 = vunpack.c.0.s8 %v992
    %v994 = vlaneseq
    %v995 = vshrl.u32 %v994, 7
    %v996 = vsub.s32 %v993, %v995
    %v997 = vrot.slane %v975, %v996
    %v999 = vunpack.c.l.s4 1983009808
    %v1000 = vunpack.c.0.s8 %v999
    %v1001 = vlaneseq
    %v1002 = vshrl.u32 %v1001, 7
    %v1003 = vsub.s32 %v1000, %v1002
    %v1004 = vrot.slane %v976, %v1003
    %v1005 = vcombine.low %v983, %v997
    %v1006 = vcombine.high %v983, %v997
    %v1007 = vcombine.low %v990, %v1004
    %v1008 = vcombine.high %v990, %v1004
    %v1009 = vcombine.low %v177, %v179
    %v1010 = vcombine.high %v177, %v179
    %v1011 = vcombine.low %v181, %v183
    %v1012 = vcombine.high %v181, %v183
    %v1014 = vunpack.c.l.s4 1983009808
    %v1015 = vunpack.c.0.s8 %v1014
    %v1016 = vlaneseq
    %v1017 = vshrl.u32 %v1016, 7
    %v1018 = vsub.s32 %v1015, %v1017
    %v1019 = vrot.slane %v1009, %v1018
    %v1021 = vunpack.c.l.s4 1983009808
    %v1022 = vunpack.c.0.s8 %v1021
    %v1023 = vlaneseq
    %v1024 = vshrl.u32 %v1023, 7
    %v1025 = vsub.s32 %v1022, %v1024
    %v1026 = vrot.slane %v1010, %v1025
    %v1028 = vunpack.c.l.s4 1983009808
    %v1029 = vunpack.c.0.s8 %v1028
    %v1030 = vlaneseq
    %v1031 = vshrl.u32 %v1030, 7
    %v1032 = vsub.s32 %v1029, %v1031
    %v1033 = vrot.slane %v1011, %v1032
    %v1035 = vunpack.c.l.s4 1983009808
    %v1036 = vunpack.c.0.s8 %v1035
    %v1037 = vlaneseq
    %v1038 = vshrl.u32 %v1037, 7
    %v1039 = vsub.s32 %v1036, %v1038
    %v1040 = vrot.slane %v1012, %v1039
    %v1041 = vcombine.low %v1019, %v1033
    %v1042 = vcombine.high %v1019, %v1033
    %v1043 = vcombine.low %v1026, %v1040
    %v1044 = vcombine.high %v1026, %v1040
    %v1045 = vcombine.low %v178, %v180
    %v1046 = vcombine.high %v178, %v180
    %v1047 = vcombine.low %v182, %v184
    %v1048 = vcombine.high %v182, %v184
    %v1050 = vunpack.c.l.s4 1983009808
    %v1051 = vunpack.c.0.s8 %v1050
    %v1052 = vlaneseq
    %v1053 = vshrl.u32 %v1052, 7
    %v1054 = vsub.s32 %v1051, %v1053
    %v1055 = vrot.slane %v1045, %v1054
    %v1057 = vunpack.c.l.s4 1983009808
    %v1058 = vunpack.c.0.s8 %v1057
    %v1059 = vlaneseq
    %v1060 = vshrl.u32 %v1059, 7
    %v1061 = vsub.s32 %v1058, %v1060
    %v1062 = vrot.slane %v1046, %v1061
    %v1064 = vunpack.c.l.s4 1983009808
    %v1065 = vunpack.c.0.s8 %v1064
    %v1066 = vlaneseq
    %v1067 = vshrl.u32 %v1066, 7
    %v1068 = vsub.s32 %v1065, %v1067
    %v1069 = vrot.slane %v1047, %v1068
    %v1071 = vunpack.c.l.s4 1983009808
    %v1072 = vunpack.c.0.s8 %v1071
    %v1073 = vlaneseq
    %v1074 = vshrl.u32 %v1073, 7
    %v1075 = vsub.s32 %v1072, %v1074
    %v1076 = vrot.slane %v1048, %v1075
    %v1077 = vcombine.low %v1055, %v1069
    %v1078 = vcombine.high %v1055, %v1069
    %v1079 = vcombine.low %v1062, %v1076
    %v1080 = vcombine.high %v1062, %v1076
    %v1081 = vcombine.low %v185, %v187
    %v1082 = vcombine.high %v185, %v187
    %v1083 = vcombine.low %v189, %v191
    %v1084 = vcombine.high %v189, %v191
    %v1086 = vunpack.c.l.s4 1983009808
    %v1087 = vunpack.c.0.s8 %v1086
    %v1088 = vlaneseq
    %v1089 = vshrl.u32 %v1088, 7
    %v1090 = vsub.s32 %v1087, %v1089
    %v1091 = vrot.slane %v1081, %v1090
    %v1093 = vunpack.c.l.s4 1983009808
    %v1094 = vunpack.c.0.s8 %v1093
    %v1095 = vlaneseq
    %v1096 = vshrl.u32 %v1095, 7
    %v1097 = vsub.s32 %v1094, %v1096
    %v1098 = vrot.slane %v1082, %v1097
    %v1100 = vunpack.c.l.s4 1983009808
    %v1101 = vunpack.c.0.s8 %v1100
    %v1102 = vlaneseq
    %v1103 = vshrl.u32 %v1102, 7
    %v1104 = vsub.s32 %v1101, %v1103
    %v1105 = vrot.slane %v1083, %v1104
    %v1107 = vunpack.c.l.s4 1983009808
    %v1108 = vunpack.c.0.s8 %v1107
    %v1109 = vlaneseq
    %v1110 = vshrl.u32 %v1109, 7
    %v1111 = vsub.s32 %v1108, %v1110
    %v1112 = vrot.slane %v1084, %v1111
    %v1113 = vcombine.low %v1091, %v1105
    %v1114 = vcombine.high %v1091, %v1105
    %v1115 = vcombine.low %v1098, %v1112
    %v1116 = vcombine.high %v1098, %v1112
    %v1117 = vcombine.low %v186, %v188
    %v1118 = vcombine.high %v186, %v188
    %v1119 = vcombine.low %v190, %v192
    %v1120 = vcombine.high %v190, %v192
    %v1122 = vunpack.c.l.s4 1983009808
    %v1123 = vunpack.c.0.s8 %v1122
    %v1124 = vlaneseq
    %v1125 = vshrl.u32 %v1124, 7
    %v1126 = vsub.s32 %v1123, %v1125
    %v1127 = vrot.slane %v1117, %v1126
    %v1129 = vunpack.c.l.s4 1983009808
    %v1130 = vunpack.c.0.s8 %v1129
    %v1131 = vlaneseq
    %v1132 = vshrl.u32 %v1131, 7
    %v1133 = vsub.s32 %v1130, %v1132
    %v1134 = vrot.slane %v1118, %v1133
    %v1136 = vunpack.c.l.s4 1983009808
    %v1137 = vunpack.c.0.s8 %v1136
    %v1138 = vlaneseq
    %v1139 = vshrl.u32 %v1138, 7
    %v1140 = vsub.s32 %v1137, %v1139
    %v1141 = vrot.slane %v1119, %v1140
    %v1143 = vunpack.c.l.s4 1983009808
    %v1144 = vunpack.c.0.s8 %v1143
    %v1145 = vlaneseq
    %v1146 = vshrl.u32 %v1145, 7
    %v1147 = vsub.s32 %v1144, %v1146
    %v1148 = vrot.slane %v1120, %v1147
    %v1149 = vcombine.low %v1127, %v1141
    %v1150 = vcombine.high %v1127, %v1141
    %v1151 = vcombine.low %v1134, %v1148
    %v1152 = vcombine.high %v1134, %v1148
    %v1153 = vcombine.low %v193, %v195
    %v1154 = vcombine.high %v193, %v195
    %v1155 = vcombine.low %v197, %v199
    %v1156 = vcombine.high %v197, %v199
    %v1158 = vunpack.c.l.s4 1983009808
    %v1159 = vunpack.c.0.s8 %v1158
    %v1160 = vlaneseq
    %v1161 = vshrl.u32 %v1160, 7
    %v1162 = vsub.s32 %v1159, %v1161
    %v1163 = vrot.slane %v1153, %v1162
    %v1165 = vunpack.c.l.s4 1983009808
    %v1166 = vunpack.c.0.s8 %v1165
    %v1167 = vlaneseq
    %v1168 = vshrl.u32 %v1167, 7
    %v1169 = vsub.s32 %v1166, %v1168
    %v1170 = vrot.slane %v1154, %v1169
    %v1172 = vunpack.c.l.s4 1983009808
    %v1173 = vunpack.c.0.s8 %v1172
    %v1174 = vlaneseq
    %v1175 = vshrl.u32 %v1174, 7
    %v1176 = vsub.s32 %v1173, %v1175
    %v1177 = vrot.slane %v1155, %v1176
    %v1179 = vunpack.c.l.s4 1983009808
    %v1180 = vunpack.c.0.s8 %v1179
    %v1181 = vlaneseq
    %v1182 = vshrl.u32 %v1181, 7
    %v1183 = vsub.s32 %v1180, %v1182
    %v1184 = vrot.slane %v1156, %v1183
    %v1185 = vcombine.low %v1163, %v1177
    %v1186 = vcombine.high %v1163, %v1177
    %v1187 = vcombine.low %v1170, %v1184
    %v1188 = vcombine.high %v1170, %v1184
    %v1189 = vcombine.low %v194, %v196
    %v1190 = vcombine.high %v194, %v196
    %v1191 = vcombine.low %v198, %v200
    %v1192 = vcombine.high %v198, %v200
    %v1194 = vunpack.c.l.s4 1983009808
    %v1195 = vunpack.c.0.s8 %v1194
    %v1196 = vlaneseq
    %v1197 = vshrl.u32 %v1196, 7
    %v1198 = vsub.s32 %v1195, %v1197
    %v1199 = vrot.slane %v1189, %v1198
    %v1201 = vunpack.c.l.s4 1983009808
    %v1202 = vunpack.c.0.s8 %v1201
    %v1203 = vlaneseq
    %v1204 = vshrl.u32 %v1203, 7
    %v1205 = vsub.s32 %v1202, %v1204
    %v1206 = vrot.slane %v1190, %v1205
    %v1208 = vunpack.c.l.s4 1983009808
    %v1209 = vunpack.c.0.s8 %v1208
    %v1210 = vlaneseq
    %v1211 = vshrl.u32 %v1210, 7
    %v1212 = vsub.s32 %v1209, %v1211
    %v1213 = vrot.slane %v1191, %v1212
    %v1215 = vunpack.c.l.s4 1983009808
    %v1216 = vunpack.c.0.s8 %v1215
    %v1217 = vlaneseq
    %v1218 = vshrl.u32 %v1217, 7
    %v1219 = vsub.s32 %v1216, %v1218
    %v1220 = vrot.slane %v1192, %v1219
    %v1221 = vcombine.low %v1199, %v1213
    %v1222 = vcombine.high %v1199, %v1213
    %v1223 = vcombine.low %v1206, %v1220
    %v1224 = vcombine.high %v1206, %v1220
    %v1225 = vcombine.low %v201, %v203
    %v1226 = vcombine.high %v201, %v203
    %v1227 = vcombine.low %v205, %v207
    %v1228 = vcombine.high %v205, %v207
    %v1230 = vunpack.c.l.s4 1983009808
    %v1231 = vunpack.c.0.s8 %v1230
    %v1232 = vlaneseq
    %v1233 = vshrl.u32 %v1232, 7
    %v1234 = vsub.s32 %v1231, %v1233
    %v1235 = vrot.slane %v1225, %v1234
    %v1237 = vunpack.c.l.s4 1983009808
    %v1238 = vunpack.c.0.s8 %v1237
    %v1239 = vlaneseq
    %v1240 = vshrl.u32 %v1239, 7
    %v1241 = vsub.s32 %v1238, %v1240
    %v1242 = vrot.slane %v1226, %v1241
    %v1244 = vunpack.c.l.s4 1983009808
    %v1245 = vunpack.c.0.s8 %v1244
    %v1246 = vlaneseq
    %v1247 = vshrl.u32 %v1246, 7
    %v1248 = vsub.s32 %v1245, %v1247
    %v1249 = vrot.slane %v1227, %v1248
    %v1251 = vunpack.c.l.s4 1983009808
    %v1252 = vunpack.c.0.s8 %v1251
    %v1253 = vlaneseq
    %v1254 = vshrl.u32 %v1253, 7
    %v1255 = vsub.s32 %v1252, %v1254
    %v1256 = vrot.slane %v1228, %v1255
    %v1257 = vcombine.low %v1235, %v1249
    %v1258 = vcombine.high %v1235, %v1249
    %v1259 = vcombine.low %v1242, %v1256
    %v1260 = vcombine.high %v1242, %v1256
    %v1261 = vcombine.low %v202, %v204
    %v1262 = vcombine.high %v202, %v204
    %v1263 = vcombine.low %v206, %v208
    %v1264 = vcombine.high %v206, %v208
    %v1266 = vunpack.c.l.s4 1983009808
    %v1267 = vunpack.c.0.s8 %v1266
    %v1268 = vlaneseq
    %v1269 = vshrl.u32 %v1268, 7
    %v1270 = vsub.s32 %v1267, %v1269
    %v1271 = vrot.slane %v1261, %v1270
    %v1273 = vunpack.c.l.s4 1983009808
    %v1274 = vunpack.c.0.s8 %v1273
    %v1275 = vlaneseq
    %v1276 = vshrl.u32 %v1275, 7
    %v1277 = vsub.s32 %v1274, %v1276
    %v1278 = vrot.slane %v1262, %v1277
    %v1280 = vunpack.c.l.s4 1983009808
    %v1281 = vunpack.c.0.s8 %v1280
    %v1282 = vlaneseq
    %v1283 = vshrl.u32 %v1282, 7
    %v1284 = vsub.s32 %v1281, %v1283
    %v1285 = vrot.slane %v1263, %v1284
    %v1287 = vunpack.c.l.s4 1983009808
    %v1288 = vunpack.c.0.s8 %v1287
    %v1289 = vlaneseq
    %v1290 = vshrl.u32 %v1289, 7
    %v1291 = vsub.s32 %v1288, %v1290
    %v1292 = vrot.slane %v1264, %v1291
    %v1293 = vcombine.low %v1271, %v1285
    %v1294 = vcombine.high %v1271, %v1285
    %v1295 = vcombine.low %v1278, %v1292
    %v1296 = vcombine.high %v1278, %v1292
    %v1297 = vcombine.low %v209, %v211
    %v1298 = vcombine.high %v209, %v211
    %v1299 = vcombine.low %v213, %v215
    %v1300 = vcombine.high %v213, %v215
    %v1302 = vunpack.c.l.s4 1983009808
    %v1303 = vunpack.c.0.s8 %v1302
    %v1304 = vlaneseq
    %v1305 = vshrl.u32 %v1304, 7
    %v1306 = vsub.s32 %v1303, %v1305
    %v1307 = vrot.slane %v1297, %v1306
    %v1309 = vunpack.c.l.s4 1983009808
    %v1310 = vunpack.c.0.s8 %v1309
    %v1311 = vlaneseq
    %v1312 = vshrl.u32 %v1311, 7
    %v1313 = vsub.s32 %v1310, %v1312
    %v1314 = vrot.slane %v1298, %v1313
    %v1316 = vunpack.c.l.s4 1983009808
    %v1317 = vunpack.c.0.s8 %v1316
    %v1318 = vlaneseq
    %v1319 = vshrl.u32 %v1318, 7
    %v1320 = vsub.s32 %v1317, %v1319
    %v1321 = vrot.slane %v1299, %v1320
    %v1323 = vunpack.c.l.s4 1983009808
    %v1324 = vunpack.c.0.s8 %v1323
    %v1325 = vlaneseq
    %v1326 = vshrl.u32 %v1325, 7
    %v1327 = vsub.s32 %v1324, %v1326
    %v1328 = vrot.slane %v1300, %v1327
    %v1329 = vcombine.low %v1307, %v1321
    %v1330 = vcombine.high %v1307, %v1321
    %v1331 = vcombine.low %v1314, %v1328
    %v1332 = vcombine.high %v1314, %v1328
    %v1333 = vcombine.low %v210, %v212
    %v1334 = vcombine.high %v210, %v212
    %v1335 = vcombine.low %v214, %v216
    %v1336 = vcombine.high %v214, %v216
    %v1338 = vunpack.c.l.s4 1983009808
    %v1339 = vunpack.c.0.s8 %v1338
    %v1340 = vlaneseq
    %v1341 = vshrl.u32 %v1340, 7
    %v1342 = vsub.s32 %v1339, %v1341
    %v1343 = vrot.slane %v1333, %v1342
    %v1345 = vunpack.c.l.s4 1983009808
    %v1346 = vunpack.c.0.s8 %v1345
    %v1347 = vlaneseq
    %v1348 = vshrl.u32 %v1347, 7
    %v1349 = vsub.s32 %v1346, %v1348
    %v1350 = vrot.slane %v1334, %v1349
    %v1352 = vunpack.c.l.s4 1983009808
    %v1353 = vunpack.c.0.s8 %v1352
    %v1354 = vlaneseq
    %v1355 = vshrl.u32 %v1354, 7
    %v1356 = vsub.s32 %v1353, %v1355
    %v1357 = vrot.slane %v1335, %v1356
    %v1359 = vunpack.c.l.s4 1983009808
    %v1360 = vunpack.c.0.s8 %v1359
    %v1361 = vlaneseq
    %v1362 = vshrl.u32 %v1361, 7
    %v1363 = vsub.s32 %v1360, %v1362
    %v1364 = vrot.slane %v1336, %v1363
    %v1365 = vcombine.low %v1343, %v1357
    %v1366 = vcombine.high %v1343, %v1357
    %v1367 = vcombine.low %v1350, %v1364
    %v1368 = vcombine.high %v1350, %v1364
    %v1369 = vcombine.low %v217, %v219
    %v1370 = vcombine.high %v217, %v219
    %v1371 = vcombine.low %v221, %v223
    %v1372 = vcombine.high %v221, %v223
    %v1374 = vunpack.c.l.s4 1983009808
    %v1375 = vunpack.c.0.s8 %v1374
    %v1376 = vlaneseq
    %v1377 = vshrl.u32 %v1376, 7
    %v1378 = vsub.s32 %v1375, %v1377
    %v1379 = vrot.slane %v1369, %v1378
    %v1381 = vunpack.c.l.s4 1983009808
    %v1382 = vunpack.c.0.s8 %v1381
    %v1383 = vlaneseq
    %v1384 = vshrl.u32 %v1383, 7
    %v1385 = vsub.s32 %v1382, %v1384
    %v1386 = vrot.slane %v1370, %v1385
    %v1388 = vunpack.c.l.s4 1983009808
    %v1389 = vunpack.c.0.s8 %v1388
    %v1390 = vlaneseq
    %v1391 = vshrl.u32 %v1390, 7
    %v1392 = vsub.s32 %v1389, %v1391
    %v1393 = vrot.slane %v1371, %v1392
    %v1395 = vunpack.c.l.s4 1983009808
    %v1396 = vunpack.c.0.s8 %v1395
    %v1397 = vlaneseq
    %v1398 = vshrl.u32 %v1397, 7
    %v1399 = vsub.s32 %v1396, %v1398
    %v1400 = vrot.slane %v1372, %v1399
    %v1401 = vcombine.low %v1379, %v1393
    %v1402 = vcombine.high %v1379, %v1393
    %v1403 = vcombine.low %v1386, %v1400
    %v1404 = vcombine.high %v1386, %v1400
    %v1405 = vcombine.low %v218, %v220
    %v1406 = vcombine.high %v218, %v220
    %v1407 = vcombine.low %v222, %v224
    %v1408 = vcombine.high %v222, %v224
    %v1410 = vunpack.c.l.s4 1983009808
    %v1411 = vunpack.c.0.s8 %v1410
    %v1412 = vlaneseq
    %v1413 = vshrl.u32 %v1412, 7
    %v1414 = vsub.s32 %v1411, %v1413
    %v1415 = vrot.slane %v1405, %v1414
    %v1417 = vunpack.c.l.s4 1983009808
    %v1418 = vunpack.c.0.s8 %v1417
    %v1419 = vlaneseq
    %v1420 = vshrl.u32 %v1419, 7
    %v1421 = vsub.s32 %v1418, %v1420
    %v1422 = vrot.slane %v1406, %v1421
    %v1424 = vunpack.c.l.s4 1983009808
    %v1425 = vunpack.c.0.s8 %v1424
    %v1426 = vlaneseq
    %v1427 = vshrl.u32 %v1426, 7
    %v1428 = vsub.s32 %v1425, %v1427
    %v1429 = vrot.slane %v1407, %v1428
    %v1431 = vunpack.c.l.s4 1983009808
    %v1432 = vunpack.c.0.s8 %v1431
    %v1433 = vlaneseq
    %v1434 = vshrl.u32 %v1433, 7
    %v1435 = vsub.s32 %v1432, %v1434
    %v1436 = vrot.slane %v1408, %v1435
    %v1437 = vcombine.low %v1415, %v1429
    %v1438 = vcombine.high %v1415, %v1429
    %v1439 = vcombine.low %v1422, %v1436
    %v1440 = vcombine.high %v1422, %v1436
    %v1441 = vcombine.low %v225, %v227
    %v1442 = vcombine.high %v225, %v227
    %v1443 = vcombine.low %v229, %v231
    %v1444 = vcombine.high %v229, %v231
    %v1446 = vunpack.c.l.s4 1983009808
    %v1447 = vunpack.c.0.s8 %v1446
    %v1448 = vlaneseq
    %v1449 = vshrl.u32 %v1448, 7
    %v1450 = vsub.s32 %v1447, %v1449
    %v1451 = vrot.slane %v1441, %v1450
    %v1453 = vunpack.c.l.s4 1983009808
    %v1454 = vunpack.c.0.s8 %v1453
    %v1455 = vlaneseq
    %v1456 = vshrl.u32 %v1455, 7
    %v1457 = vsub.s32 %v1454, %v1456
    %v1458 = vrot.slane %v1442, %v1457
    %v1460 = vunpack.c.l.s4 1983009808
    %v1461 = vunpack.c.0.s8 %v1460
    %v1462 = vlaneseq
    %v1463 = vshrl.u32 %v1462, 7
    %v1464 = vsub.s32 %v1461, %v1463
    %v1465 = vrot.slane %v1443, %v1464
    %v1467 = vunpack.c.l.s4 1983009808
    %v1468 = vunpack.c.0.s8 %v1467
    %v1469 = vlaneseq
    %v1470 = vshrl.u32 %v1469, 7
    %v1471 = vsub.s32 %v1468, %v1470
    %v1472 = vrot.slane %v1444, %v1471
    %v1473 = vcombine.low %v1451, %v1465
    %v1474 = vcombine.high %v1451, %v1465
    %v1475 = vcombine.low %v1458, %v1472
    %v1476 = vcombine.high %v1458, %v1472
    %v1477 = vcombine.low %v226, %v228
    %v1478 = vcombine.high %v226, %v228
    %v1479 = vcombine.low %v230, %v232
    %v1480 = vcombine.high %v230, %v232
    %v1482 = vunpack.c.l.s4 1983009808
    %v1483 = vunpack.c.0.s8 %v1482
    %v1484 = vlaneseq
    %v1485 = vshrl.u32 %v1484, 7
    %v1486 = vsub.s32 %v1483, %v1485
    %v1487 = vrot.slane %v1477, %v1486
    %v1489 = vunpack.c.l.s4 1983009808
    %v1490 = vunpack.c.0.s8 %v1489
    %v1491 = vlaneseq
    %v1492 = vshrl.u32 %v1491, 7
    %v1493 = vsub.s32 %v1490, %v1492
    %v1494 = vrot.slane %v1478, %v1493
    %v1496 = vunpack.c.l.s4 1983009808
    %v1497 = vunpack.c.0.s8 %v1496
    %v1498 = vlaneseq
    %v1499 = vshrl.u32 %v1498, 7
    %v1500 = vsub.s32 %v1497, %v1499
    %v1501 = vrot.slane %v1479, %v1500
    %v1503 = vunpack.c.l.s4 1983009808
    %v1504 = vunpack.c.0.s8 %v1503
    %v1505 = vlaneseq
    %v1506 = vshrl.u32 %v1505, 7
    %v1507 = vsub.s32 %v1504, %v1506
    %v1508 = vrot.slane %v1480, %v1507
    %v1509 = vcombine.low %v1487, %v1501
    %v1510 = vcombine.high %v1487, %v1501
    %v1511 = vcombine.low %v1494, %v1508
    %v1512 = vcombine.high %v1494, %v1508
    %v1641 = vpack.c.bf16 %v465, %v393
    %v1642 = vpack.c.bf16 %v466, %v394
    %v1643 = vpack.c.bf16 %v467, %v395
    %v1644 = vpack.c.bf16 %v468, %v396
    %v1645 = vpack.c.bf16 %v501, %v429
    %v1646 = vpack.c.bf16 %v502, %v430
    %v1647 = vpack.c.bf16 %v503, %v431
    %v1648 = vpack.c.bf16 %v504, %v432
    %v1649 = vpack.c.bf16 %v609, %v537
    %v1650 = vpack.c.bf16 %v610, %v538
    %v1651 = vpack.c.bf16 %v611, %v539
    %v1652 = vpack.c.bf16 %v612, %v540
    %v1653 = vpack.c.bf16 %v645, %v573
    %v1654 = vpack.c.bf16 %v646, %v574
    %v1655 = vpack.c.bf16 %v647, %v575
    %v1656 = vpack.c.bf16 %v648, %v576
    %v1657 = vpack.c.bf16 %v753, %v681
    %v1658 = vpack.c.bf16 %v754, %v682
    %v1659 = vpack.c.bf16 %v755, %v683
    %v1660 = vpack.c.bf16 %v756, %v684
    %v1661 = vpack.c.bf16 %v789, %v717
    %v1662 = vpack.c.bf16 %v790, %v718
    %v1663 = vpack.c.bf16 %v791, %v719
    %v1664 = vpack.c.bf16 %v792, %v720
    %v1665 = vpack.c.bf16 %v897, %v825
    %v1666 = vpack.c.bf16 %v898, %v826
    %v1667 = vpack.c.bf16 %v899, %v827
    %v1668 = vpack.c.bf16 %v900, %v828
    %v1669 = vpack.c.bf16 %v933, %v861
    %v1670 = vpack.c.bf16 %v934, %v862
    %v1671 = vpack.c.bf16 %v935, %v863
    %v1672 = vpack.c.bf16 %v936, %v864
    %v1673 = vpack.c.bf16 %v1041, %v969
    %v1674 = vpack.c.bf16 %v1042, %v970
    %v1675 = vpack.c.bf16 %v1043, %v971
    %v1676 = vpack.c.bf16 %v1044, %v972
    %v1677 = vpack.c.bf16 %v1077, %v1005
    %v1678 = vpack.c.bf16 %v1078, %v1006
    %v1679 = vpack.c.bf16 %v1079, %v1007
    %v1680 = vpack.c.bf16 %v1080, %v1008
    %v1681 = vpack.c.bf16 %v1185, %v1113
    %v1682 = vpack.c.bf16 %v1186, %v1114
    %v1683 = vpack.c.bf16 %v1187, %v1115
    %v1684 = vpack.c.bf16 %v1188, %v1116
    %v1685 = vpack.c.bf16 %v1221, %v1149
    %v1686 = vpack.c.bf16 %v1222, %v1150
    %v1687 = vpack.c.bf16 %v1223, %v1151
    %v1688 = vpack.c.bf16 %v1224, %v1152
    %v1689 = vpack.c.bf16 %v1329, %v1257
    %v1690 = vpack.c.bf16 %v1330, %v1258
    %v1691 = vpack.c.bf16 %v1331, %v1259
    %v1692 = vpack.c.bf16 %v1332, %v1260
    %v1693 = vpack.c.bf16 %v1365, %v1293
    %v1694 = vpack.c.bf16 %v1366, %v1294
    %v1695 = vpack.c.bf16 %v1367, %v1295
    %v1696 = vpack.c.bf16 %v1368, %v1296
    %v1697 = vpack.c.bf16 %v1473, %v1401
    %v1698 = vpack.c.bf16 %v1474, %v1402
    %v1699 = vpack.c.bf16 %v1475, %v1403
    %v1700 = vpack.c.bf16 %v1476, %v1404
    %v1701 = vpack.c.bf16 %v1509, %v1437
    %v1702 = vpack.c.bf16 %v1510, %v1438
    %v1703 = vpack.c.bf16 %v1511, %v1439
    %v1704 = vpack.c.bf16 %v1512, %v1440
    %v1705 = vld [vmem:[#allocation5] sm:$0xf]
    %v1706 = vld [vmem:[#allocation5 + $0x4] sm:$0xf]
    %v1707 = vld [vmem:[#allocation5 + $0x8] sm:$0xf]
    %v1708 = vld [vmem:[#allocation5 + $0xc] sm:$0xf]
    %v1709 = vld [vmem:[#allocation5 + $0x10] sm:$0xf]
    %v1710 = vld [vmem:[#allocation5 + $0x14] sm:$0xf]
    %v1711 = vld [vmem:[#allocation5 + $0x18] sm:$0xf]
    %v1712 = vld [vmem:[#allocation5 + $0x1c] sm:$0xf]
    %v1713 = vld [vmem:[#allocation5 + $0x20] sm:$0xf]
    %v1714 = vld [vmem:[#allocation5 + $0x24] sm:$0xf]
    %v1715 = vld [vmem:[#allocation5 + $0x28] sm:$0xf]
    %v1716 = vld [vmem:[#allocation5 + $0x2c] sm:$0xf]
    %v1717 = vld [vmem:[#allocation5 + $0x30] sm:$0xf]
    %v1718 = vld [vmem:[#allocation5 + $0x34] sm:$0xf]
    %v1719 = vld [vmem:[#allocation5 + $0x38] sm:$0xf]
    %v1720 = vld [vmem:[#allocation5 + $0x3c] sm:$0xf]
    %v1721 = vld [vmem:[#allocation5 + $0x40] sm:$0xf]
    %v1722 = vld [vmem:[#allocation5 + $0x44] sm:$0xf]
    %v1723 = vld [vmem:[#allocation5 + $0x48] sm:$0xf]
    %v1724 = vld [vmem:[#allocation5 + $0x4c] sm:$0xf]
    %v1725 = vld [vmem:[#allocation5 + $0x50] sm:$0xf]
    %v1726 = vld [vmem:[#allocation5 + $0x54] sm:$0xf]
    %v1727 = vld [vmem:[#allocation5 + $0x58] sm:$0xf]
    %v1728 = vld [vmem:[#allocation5 + $0x5c] sm:$0xf]
    %v1729 = vld [vmem:[#allocation5 + $0x60] sm:$0xf]
    %v1730 = vld [vmem:[#allocation5 + $0x64] sm:$0xf]
    %v1731 = vld [vmem:[#allocation5 + $0x68] sm:$0xf]
    %v1732 = vld [vmem:[#allocation5 + $0x6c] sm:$0xf]
    %v1733 = vld [vmem:[#allocation5 + $0x70] sm:$0xf]
    %v1734 = vld [vmem:[#allocation5 + $0x74] sm:$0xf]
    %v1735 = vld [vmem:[#allocation5 + $0x78] sm:$0xf]
    %v1736 = vld [vmem:[#allocation5 + $0x7c] sm:$0xf]
    %v1737 = vld [vmem:[#allocation5 + $0x80] sm:$0xf]
    %v1738 = vld [vmem:[#allocation5 + $0x84] sm:$0xf]
    %v1739 = vld [vmem:[#allocation5 + $0x88] sm:$0xf]
    %v1740 = vld [vmem:[#allocation5 + $0x8c] sm:$0xf]
    %v1741 = vld [vmem:[#allocation5 + $0x90] sm:$0xf]
    %v1742 = vld [vmem:[#allocation5 + $0x94] sm:$0xf]
    %v1743 = vld [vmem:[#allocation5 + $0x98] sm:$0xf]
    %v1744 = vld [vmem:[#allocation5 + $0x9c] sm:$0xf]
    %v1745 = vld [vmem:[#allocation5 + $0xa0] sm:$0xf]
    %v1746 = vld [vmem:[#allocation5 + $0xa4] sm:$0xf]
    %v1747 = vld [vmem:[#allocation5 + $0xa8] sm:$0xf]
    %v1748 = vld [vmem:[#allocation5 + $0xac] sm:$0xf]
    %v1749 = vld [vmem:[#allocation5 + $0xb0] sm:$0xf]
    %v1750 = vld [vmem:[#allocation5 + $0xb4] sm:$0xf]
    %v1751 = vld [vmem:[#allocation5 + $0xb8] sm:$0xf]
    %v1752 = vld [vmem:[#allocation5 + $0xbc] sm:$0xf]
    %v1753 = vld [vmem:[#allocation5 + $0xc0] sm:$0xf]
    %v1754 = vld [vmem:[#allocation5 + $0xc4] sm:$0xf]
    %v1755 = vld [vmem:[#allocation5 + $0xc8] sm:$0xf]
    %v1756 = vld [vmem:[#allocation5 + $0xcc] sm:$0xf]
    %v1757 = vld [vmem:[#allocation5 + $0xd0] sm:$0xf]
    %v1758 = vld [vmem:[#allocation5 + $0xd4] sm:$0xf]
    %v1759 = vld [vmem:[#allocation5 + $0xd8] sm:$0xf]
    %v1760 = vld [vmem:[#allocation5 + $0xdc] sm:$0xf]
    %v1761 = vld [vmem:[#allocation5 + $0xe0] sm:$0xf]
    %v1762 = vld [vmem:[#allocation5 + $0xe4] sm:$0xf]
    %v1763 = vld [vmem:[#allocation5 + $0xe8] sm:$0xf]
    %v1764 = vld [vmem:[#allocation5 + $0xec] sm:$0xf]
    %v1765 = vld [vmem:[#allocation5 + $0xf0] sm:$0xf]
    %v1766 = vld [vmem:[#allocation5 + $0xf4] sm:$0xf]
    %v1767 = vld [vmem:[#allocation5 + $0xf8] sm:$0xf]
    %v1768 = vld [vmem:[#allocation5 + $0xfc] sm:$0xf]
    %v1769 = vld [vmem:[#allocation5 + $0x100] sm:$0xf]
    %v1770 = vld [vmem:[#allocation5 + $0x104] sm:$0xf]
    %v1771 = vld [vmem:[#allocation5 + $0x108] sm:$0xf]
    %v1772 = vld [vmem:[#allocation5 + $0x10c] sm:$0xf]
    %v1773 = vld [vmem:[#allocation5 + $0x110] sm:$0xf]
    %v1774 = vld [vmem:[#allocation5 + $0x114] sm:$0xf]
    %v1775 = vld [vmem:[#allocation5 + $0x118] sm:$0xf]
    %v1776 = vld [vmem:[#allocation5 + $0x11c] sm:$0xf]
    %v1777 = vld [vmem:[#allocation5 + $0x120] sm:$0xf]
    %v1778 = vld [vmem:[#allocation5 + $0x124] sm:$0xf]
    %v1779 = vld [vmem:[#allocation5 + $0x128] sm:$0xf]
    %v1780 = vld [vmem:[#allocation5 + $0x12c] sm:$0xf]
    %v1781 = vld [vmem:[#allocation5 + $0x130] sm:$0xf]
    %v1782 = vld [vmem:[#allocation5 + $0x134] sm:$0xf]
    %v1783 = vld [vmem:[#allocation5 + $0x138] sm:$0xf]
    %v1784 = vld [vmem:[#allocation5 + $0x13c] sm:$0xf]
    %v1785 = vld [vmem:[#allocation5 + $0x140] sm:$0xf]
    %v1786 = vld [vmem:[#allocation5 + $0x144] sm:$0xf]
    %v1787 = vld [vmem:[#allocation5 + $0x148] sm:$0xf]
    %v1788 = vld [vmem:[#allocation5 + $0x14c] sm:$0xf]
    %v1789 = vld [vmem:[#allocation5 + $0x150] sm:$0xf]
    %v1790 = vld [vmem:[#allocation5 + $0x154] sm:$0xf]
    %v1791 = vld [vmem:[#allocation5 + $0x158] sm:$0xf]
    %v1792 = vld [vmem:[#allocation5 + $0x15c] sm:$0xf]
    %v1793 = vld [vmem:[#allocation5 + $0x160] sm:$0xf]
    %v1794 = vld [vmem:[#allocation5 + $0x164] sm:$0xf]
    %v1795 = vld [vmem:[#allocation5 + $0x168] sm:$0xf]
    %v1796 = vld [vmem:[#allocation5 + $0x16c] sm:$0xf]
    %v1797 = vld [vmem:[#allocation5 + $0x170] sm:$0xf]
    %v1798 = vld [vmem:[#allocation5 + $0x174] sm:$0xf]
    %v1799 = vld [vmem:[#allocation5 + $0x178] sm:$0xf]
    %v1800 = vld [vmem:[#allocation5 + $0x17c] sm:$0xf]
    %v1801 = vld [vmem:[#allocation5 + $0x180] sm:$0xf]
    %v1802 = vld [vmem:[#allocation5 + $0x184] sm:$0xf]
    %v1803 = vld [vmem:[#allocation5 + $0x188] sm:$0xf]
    %v1804 = vld [vmem:[#allocation5 + $0x18c] sm:$0xf]
    %v1805 = vld [vmem:[#allocation5 + $0x190] sm:$0xf]
    %v1806 = vld [vmem:[#allocation5 + $0x194] sm:$0xf]
    %v1807 = vld [vmem:[#allocation5 + $0x198] sm:$0xf]
    %v1808 = vld [vmem:[#allocation5 + $0x19c] sm:$0xf]
    %v1809 = vld [vmem:[#allocation5 + $0x1a0] sm:$0xf]
    %v1810 = vld [vmem:[#allocation5 + $0x1a4] sm:$0xf]
    %v1811 = vld [vmem:[#allocation5 + $0x1a8] sm:$0xf]
    %v1812 = vld [vmem:[#allocation5 + $0x1ac] sm:$0xf]
    %v1813 = vld [vmem:[#allocation5 + $0x1b0] sm:$0xf]
    %v1814 = vld [vmem:[#allocation5 + $0x1b4] sm:$0xf]
    %v1815 = vld [vmem:[#allocation5 + $0x1b8] sm:$0xf]
    %v1816 = vld [vmem:[#allocation5 + $0x1bc] sm:$0xf]
    %v1817 = vld [vmem:[#allocation5 + $0x1c0] sm:$0xf]
    %v1818 = vld [vmem:[#allocation5 + $0x1c4] sm:$0xf]
    %v1819 = vld [vmem:[#allocation5 + $0x1c8] sm:$0xf]
    %v1820 = vld [vmem:[#allocation5 + $0x1cc] sm:$0xf]
    %v1821 = vld [vmem:[#allocation5 + $0x1d0] sm:$0xf]
    %v1822 = vld [vmem:[#allocation5 + $0x1d4] sm:$0xf]
    %v1823 = vld [vmem:[#allocation5 + $0x1d8] sm:$0xf]
    %v1824 = vld [vmem:[#allocation5 + $0x1dc] sm:$0xf]
    %v1825 = vld [vmem:[#allocation5 + $0x1e0] sm:$0xf]
    %v1826 = vld [vmem:[#allocation5 + $0x1e4] sm:$0xf]
    %v1827 = vld [vmem:[#allocation5 + $0x1e8] sm:$0xf]
    %v1828 = vld [vmem:[#allocation5 + $0x1ec] sm:$0xf]
    %v1829 = vld [vmem:[#allocation5 + $0x1f0] sm:$0xf]
    %v1830 = vld [vmem:[#allocation5 + $0x1f4] sm:$0xf]
    %v1831 = vld [vmem:[#allocation5 + $0x1f8] sm:$0xf]
    %v1832 = vld [vmem:[#allocation5 + $0x1fc] sm:$0xf]
    %v1833 = vld [vmem:[%s2] sm:$0x1]
    %v1835 = vlaneseq
    %v1836 = vshrl.u32 %v1835, 7
    %v1837 = vsub.s32 0, %v1836
    %v1838 = vrot.slane %v1833, %v1837
    %v1968 = vunpack.c.l.b16 %v1705
    %v1969 = vunpack.c.l.b16 %v1706
    %v1970 = vunpack.c.l.b16 %v1707
    %v1971 = vunpack.c.l.b16 %v1708
    %v1972 = vunpack.c.l.b16 %v1709
    %v1973 = vunpack.c.l.b16 %v1710
    %v1974 = vunpack.c.l.b16 %v1711
    %v1975 = vunpack.c.l.b16 %v1712
    %v1976 = vunpack.c.l.b16 %v1713
    %v1977 = vunpack.c.l.b16 %v1714
    %v1978 = vunpack.c.l.b16 %v1715
    %v1979 = vunpack.c.l.b16 %v1716
    %v1980 = vunpack.c.l.b16 %v1717
    %v1981 = vunpack.c.l.b16 %v1718
    %v1982 = vunpack.c.l.b16 %v1719
    %v1983 = vunpack.c.l.b16 %v1720
    %v1984 = vunpack.c.l.b16 %v1721
    %v1985 = vunpack.c.l.b16 %v1722
    %v1986 = vunpack.c.l.b16 %v1723
    %v1987 = vunpack.c.l.b16 %v1724
    %v1988 = vunpack.c.l.b16 %v1725
    %v1989 = vunpack.c.l.b16 %v1726
    %v1990 = vunpack.c.l.b16 %v1727
    %v1991 = vunpack.c.l.b16 %v1728
    %v1992 = vunpack.c.l.b16 %v1729
    %v1993 = vunpack.c.l.b16 %v1730
    %v1994 = vunpack.c.l.b16 %v1731
    %v1995 = vunpack.c.l.b16 %v1732
    %v1996 = vunpack.c.l.b16 %v1733
    %v1997 = vunpack.c.l.b16 %v1734
    %v1998 = vunpack.c.l.b16 %v1735
    %v1999 = vunpack.c.l.b16 %v1736
    %v2000 = vunpack.c.l.b16 %v1737
    %v2001 = vunpack.c.l.b16 %v1738
    %v2002 = vunpack.c.l.b16 %v1739
    %v2003 = vunpack.c.l.b16 %v1740
    %v2004 = vunpack.c.l.b16 %v1741
    %v2005 = vunpack.c.l.b16 %v1742
    %v2006 = vunpack.c.l.b16 %v1743
    %v2007 = vunpack.c.l.b16 %v1744
    %v2008 = vunpack.c.l.b16 %v1745
    %v2009 = vunpack.c.l.b16 %v1746
    %v2010 = vunpack.c.l.b16 %v1747
    %v2011 = vunpack.c.l.b16 %v1748
    %v2012 = vunpack.c.l.b16 %v1749
    %v2013 = vunpack.c.l.b16 %v1750
    %v2014 = vunpack.c.l.b16 %v1751
    %v2015 = vunpack.c.l.b16 %v1752
    %v2016 = vunpack.c.l.b16 %v1753
    %v2017 = vunpack.c.l.b16 %v1754
    %v2018 = vunpack.c.l.b16 %v1755
    %v2019 = vunpack.c.l.b16 %v1756
    %v2020 = vunpack.c.l.b16 %v1757
    %v2021 = vunpack.c.l.b16 %v1758
    %v2022 = vunpack.c.l.b16 %v1759
    %v2023 = vunpack.c.l.b16 %v1760
    %v2024 = vunpack.c.l.b16 %v1761
    %v2025 = vunpack.c.l.b16 %v1762
    %v2026 = vunpack.c.l.b16 %v1763
    %v2027 = vunpack.c.l.b16 %v1764
    %v2028 = vunpack.c.l.b16 %v1765
    %v2029 = vunpack.c.l.b16 %v1766
    %v2030 = vunpack.c.l.b16 %v1767
    %v2031 = vunpack.c.l.b16 %v1768
    %v2032 = vunpack.c.l.b16 %v1769
    %v2033 = vunpack.c.l.b16 %v1770
    %v2034 = vunpack.c.l.b16 %v1771
    %v2035 = vunpack.c.l.b16 %v1772
    %v2036 = vunpack.c.l.b16 %v1773
    %v2037 = vunpack.c.l.b16 %v1774
    %v2038 = vunpack.c.l.b16 %v1775
    %v2039 = vunpack.c.l.b16 %v1776
    %v2040 = vunpack.c.l.b16 %v1777
    %v2041 = vunpack.c.l.b16 %v1778
    %v2042 = vunpack.c.l.b16 %v1779
    %v2043 = vunpack.c.l.b16 %v1780
    %v2044 = vunpack.c.l.b16 %v1781
    %v2045 = vunpack.c.l.b16 %v1782
    %v2046 = vunpack.c.l.b16 %v1783
    %v2047 = vunpack.c.l.b16 %v1784
    %v2048 = vunpack.c.l.b16 %v1785
    %v2049 = vunpack.c.l.b16 %v1786
    %v2050 = vunpack.c.l.b16 %v1787
    %v2051 = vunpack.c.l.b16 %v1788
    %v2052 = vunpack.c.l.b16 %v1789
    %v2053 = vunpack.c.l.b16 %v1790
    %v2054 = vunpack.c.l.b16 %v1791
    %v2055 = vunpack.c.l.b16 %v1792
    %v2056 = vunpack.c.l.b16 %v1793
    %v2057 = vunpack.c.l.b16 %v1794
    %v2058 = vunpack.c.l.b16 %v1795
    %v2059 = vunpack.c.l.b16 %v1796
    %v2060 = vunpack.c.l.b16 %v1797
    %v2061 = vunpack.c.l.b16 %v1798
    %v2062 = vunpack.c.l.b16 %v1799
    %v2063 = vunpack.c.l.b16 %v1800
    %v2064 = vunpack.c.l.b16 %v1801
    %v2065 = vunpack.c.l.b16 %v1802
    %v2066 = vunpack.c.l.b16 %v1803
    %v2067 = vunpack.c.l.b16 %v1804
    %v2068 = vunpack.c.l.b16 %v1805
    %v2069 = vunpack.c.l.b16 %v1806
    %v2070 = vunpack.c.l.b16 %v1807
    %v2071 = vunpack.c.l.b16 %v1808
    %v2072 = vunpack.c.l.b16 %v1809
    %v2073 = vunpack.c.l.b16 %v1810
    %v2074 = vunpack.c.l.b16 %v1811
    %v2075 = vunpack.c.l.b16 %v1812
    %v2076 = vunpack.c.l.b16 %v1813
    %v2077 = vunpack.c.l.b16 %v1814
    %v2078 = vunpack.c.l.b16 %v1815
    %v2079 = vunpack.c.l.b16 %v1816
    %v2080 = vunpack.c.l.b16 %v1817
    %v2081 = vunpack.c.l.b16 %v1818
    %v2082 = vunpack.c.l.b16 %v1819
    %v2083 = vunpack.c.l.b16 %v1820
    %v2084 = vunpack.c.l.b16 %v1821
    %v2085 = vunpack.c.l.b16 %v1822
    %v2086 = vunpack.c.l.b16 %v1823
    %v2087 = vunpack.c.l.b16 %v1824
    %v2088 = vunpack.c.l.b16 %v1825
    %v2089 = vunpack.c.l.b16 %v1826
    %v2090 = vunpack.c.l.b16 %v1827
    %v2091 = vunpack.c.l.b16 %v1828
    %v2092 = vunpack.c.l.b16 %v1829
    %v2093 = vunpack.c.l.b16 %v1830
    %v2094 = vunpack.c.l.b16 %v1831
    %v2095 = vunpack.c.l.b16 %v1832
    %v2096 = vpack.c.b16 %v1969, %v1968
    %v2097 = vpack.c.b16 %v1971, %v1970
    %v2098 = vpack.c.b16 %v1973, %v1972
    %v2099 = vpack.c.b16 %v1975, %v1974
    %v2100 = vpack.c.b16 %v1977, %v1976
    %v2101 = vpack.c.b16 %v1979, %v1978
    %v2102 = vpack.c.b16 %v1981, %v1980
    %v2103 = vpack.c.b16 %v1983, %v1982
    %v2104 = vpack.c.b16 %v1985, %v1984
    %v2105 = vpack.c.b16 %v1987, %v1986
    %v2106 = vpack.c.b16 %v1989, %v1988
    %v2107 = vpack.c.b16 %v1991, %v1990
    %v2108 = vpack.c.b16 %v1993, %v1992
    %v2109 = vpack.c.b16 %v1995, %v1994
    %v2110 = vpack.c.b16 %v1997, %v1996
    %v2111 = vpack.c.b16 %v1999, %v1998
    %v2112 = vpack.c.b16 %v2001, %v2000
    %v2113 = vpack.c.b16 %v2003, %v2002
    %v2114 = vpack.c.b16 %v2005, %v2004
    %v2115 = vpack.c.b16 %v2007, %v2006
    %v2116 = vpack.c.b16 %v2009, %v2008
    %v2117 = vpack.c.b16 %v2011, %v2010
    %v2118 = vpack.c.b16 %v2013, %v2012
    %v2119 = vpack.c.b16 %v2015, %v2014
    %v2120 = vpack.c.b16 %v2017, %v2016
    %v2121 = vpack.c.b16 %v2019, %v2018
    %v2122 = vpack.c.b16 %v2021, %v2020
    %v2123 = vpack.c.b16 %v2023, %v2022
    %v2124 = vpack.c.b16 %v2025, %v2024
    %v2125 = vpack.c.b16 %v2027, %v2026
    %v2126 = vpack.c.b16 %v2029, %v2028
    %v2127 = vpack.c.b16 %v2031, %v2030
    %v2128 = vpack.c.b16 %v2033, %v2032
    %v2129 = vpack.c.b16 %v2035, %v2034
    %v2130 = vpack.c.b16 %v2037, %v2036
    %v2131 = vpack.c.b16 %v2039, %v2038
    %v2132 = vpack.c.b16 %v2041, %v2040
    %v2133 = vpack.c.b16 %v2043, %v2042
    %v2134 = vpack.c.b16 %v2045, %v2044
    %v2135 = vpack.c.b16 %v2047, %v2046
    %v2136 = vpack.c.b16 %v2049, %v2048
    %v2137 = vpack.c.b16 %v2051, %v2050
    %v2138 = vpack.c.b16 %v2053, %v2052
    %v2139 = vpack.c.b16 %v2055, %v2054
    %v2140 = vpack.c.b16 %v2057, %v2056
    %v2141 = vpack.c.b16 %v2059, %v2058
    %v2142 = vpack.c.b16 %v2061, %v2060
    %v2143 = vpack.c.b16 %v2063, %v2062
    %v2144 = vpack.c.b16 %v2065, %v2064
    %v2145 = vpack.c.b16 %v2067, %v2066
    %v2146 = vpack.c.b16 %v2069, %v2068
    %v2147 = vpack.c.b16 %v2071, %v2070
    %v2148 = vpack.c.b16 %v2073, %v2072
    %v2149 = vpack.c.b16 %v2075, %v2074
    %v2150 = vpack.c.b16 %v2077, %v2076
    %v2151 = vpack.c.b16 %v2079, %v2078
    %v2152 = vpack.c.b16 %v2081, %v2080
    %v2153 = vpack.c.b16 %v2083, %v2082
    %v2154 = vpack.c.b16 %v2085, %v2084
    %v2155 = vpack.c.b16 %v2087, %v2086
    %v2156 = vpack.c.b16 %v2089, %v2088
    %v2157 = vpack.c.b16 %v2091, %v2090
    %v2158 = vpack.c.b16 %v2093, %v2092
    %v2159 = vpack.c.b16 %v2095, %v2094
    %2224 = vmatprep.subr.bf16.mxu0 0
    %2225 = vmatpush1.bf16.msra.mxu0 %v2103
    %2226 = vmatprep.subr.bf16.mxu0 0
    %2227 = vmatpush1.bf16.msra.mxu0 %v2102
    %2228 = vmatprep.subr.bf16.mxu0 0
    %2229 = vmatpush1.bf16.msra.mxu0 %v2101
    %2230 = vmatprep.subr.bf16.mxu0 0
    %2231 = vmatpush1.bf16.msra.mxu0 %v2100
    %2232 = vmatprep.subr.bf16.mxu0 0
    %2233 = vmatpush1.bf16.msra.mxu0 %v2099
    %2234 = vmatprep.subr.bf16.mxu0 0
    %2235 = vmatpush1.bf16.msra.mxu0 %v2098
    %2236 = vmatprep.subr.bf16.mxu0 0
    %2237 = vmatpush1.bf16.msra.mxu0 %v2097
    %2238 = vmatprep.subr.bf16.mxu0 0
    %2239 = vmatpush1.bf16.msra.mxu0 %v2096
    %2240 = vmatprep.subr.bf16.mxu0 0
    %2241 = vmatpush2.bf16.msra.mxu0 %v2111
    %2242 = vmatprep.subr.bf16.mxu0 0
    %2243 = vmatpush2.bf16.msra.mxu0 %v2110
    %2244 = vmatprep.subr.bf16.mxu0 0
    %2245 = vmatpush2.bf16.msra.mxu0 %v2109
    %2246 = vmatprep.subr.bf16.mxu0 0
    %2247 = vmatpush2.bf16.msra.mxu0 %v2108
    %2248 = vmatprep.subr.bf16.mxu0 0
    %2249 = vmatpush2.bf16.msra.mxu0 %v2107
    %2250 = vmatprep.subr.bf16.mxu0 0
    %2251 = vmatpush2.bf16.msra.mxu0 %v2106
    %2252 = vmatprep.subr.bf16.mxu0 0
    %2253 = vmatpush2.bf16.msra.mxu0 %v2105
    %2254 = vmatprep.subr.bf16.mxu0 0
    %2255 = vmatpush2.bf16.msra.mxu0 %v2104
    %2256 = vmatprep.mubr.bf16.mxu0 %v1642
    %2257 = vmatmul.mubr.bf16.gmra.mxu0 %v1641
    %v2258 = vpop.f32.mrf.mxu0
    %v2259 = vadd.f32 %v1838, %v2258
    %v2260 = vpop.f32.mrf.mxu0
    %v2261 = vpop.f32.mrf.mxu0
    %v2262 = vadd.f32 %v1838, %v2261
    %v2263 = vpop.f32.mrf.mxu0
    %2264 = vmatprep.mubr.bf16.mxu0 %v1650
    %2265 = vmatmul.mubr.bf16.gmra.mxu0 %v1649
    %v2266 = vpop.f32.mrf.mxu0
    %v2267 = vadd.f32 %v1838, %v2266
    %v2268 = vpop.f32.mrf.mxu0
    %v2269 = vpop.f32.mrf.mxu0
    %v2270 = vadd.f32 %v1838, %v2269
    %v2271 = vpop.f32.mrf.mxu0
    %2272 = vmatprep.mubr.bf16.mxu0 %v1658
    %2273 = vmatmul.mubr.bf16.gmra.mxu0 %v1657
    %v2274 = vpop.f32.mrf.mxu0
    %v2275 = vadd.f32 %v1838, %v2274
    %v2276 = vpop.f32.mrf.mxu0
    %v2277 = vpop.f32.mrf.mxu0
    %v2278 = vadd.f32 %v1838, %v2277
    %v2279 = vpop.f32.mrf.mxu0
    %2280 = vmatprep.mubr.bf16.mxu0 %v1666
    %2281 = vmatmul.mubr.bf16.gmra.mxu0 %v1665
    %v2282 = vpop.f32.mrf.mxu0
    %v2283 = vadd.f32 %v1838, %v2282
    %v2284 = vpop.f32.mrf.mxu0
    %v2285 = vpop.f32.mrf.mxu0
    %v2286 = vadd.f32 %v1838, %v2285
    %v2287 = vpop.f32.mrf.mxu0
    %2288 = vmatprep.mubr.bf16.mxu0 %v1674
    %2289 = vmatmul.mubr.bf16.gmra.mxu0 %v1673
    %v2290 = vpop.f32.mrf.mxu0
    %v2291 = vadd.f32 %v1838, %v2290
    %v2292 = vpop.f32.mrf.mxu0
    %v2293 = vpop.f32.mrf.mxu0
    %v2294 = vadd.f32 %v1838, %v2293
    %v2295 = vpop.f32.mrf.mxu0
    %2296 = vmatprep.mubr.bf16.mxu0 %v1682
    %2297 = vmatmul.mubr.bf16.gmra.mxu0 %v1681
    %v2298 = vpop.f32.mrf.mxu0
    %v2299 = vadd.f32 %v1838, %v2298
    %v2300 = vpop.f32.mrf.mxu0
    %v2301 = vpop.f32.mrf.mxu0
    %v2302 = vadd.f32 %v1838, %v2301
    %v2303 = vpop.f32.mrf.mxu0
    %2304 = vmatprep.mubr.bf16.mxu0 %v1690
    %2305 = vmatmul.mubr.bf16.gmra.mxu0 %v1689
    %v2306 = vpop.f32.mrf.mxu0
    %v2307 = vadd.f32 %v1838, %v2306
    %v2308 = vpop.f32.mrf.mxu0
    %v2309 = vpop.f32.mrf.mxu0
    %v2310 = vadd.f32 %v1838, %v2309
    %v2311 = vpop.f32.mrf.mxu0
    %2312 = vmatprep.mubr.bf16.mxu0 %v1698
    %2313 = vmatmul.mubr.bf16.gmra.mxu0 %v1697
    %v2314 = vpop.f32.mrf.mxu0
    %v2315 = vadd.f32 %v1838, %v2314
    %v2316 = vpop.f32.mrf.mxu0
    %v2317 = vpop.f32.mrf.mxu0
    %v2318 = vadd.f32 %v1838, %v2317
    %v2319 = vpop.f32.mrf.mxu0
    %2320 = vdwg.mxu0
    %2321 = vmatprep.subr.bf16.mxu0 0
    %2322 = vmatpush1.bf16.msra.mxu0 %v2119
    %2323 = vmatprep.subr.bf16.mxu0 0
    %2324 = vmatpush1.bf16.msra.mxu0 %v2118
    %2325 = vmatprep.subr.bf16.mxu0 0
    %2326 = vmatpush1.bf16.msra.mxu0 %v2117
    %2327 = vmatprep.subr.bf16.mxu0 0
    %2328 = vmatpush1.bf16.msra.mxu0 %v2116
    %2329 = vmatprep.subr.bf16.mxu0 0
    %2330 = vmatpush1.bf16.msra.mxu0 %v2115
    %2331 = vmatprep.subr.bf16.mxu0 0
    %2332 = vmatpush1.bf16.msra.mxu0 %v2114
    %2333 = vmatprep.subr.bf16.mxu0 0
    %2334 = vmatpush1.bf16.msra.mxu0 %v2113
    %2335 = vmatprep.subr.bf16.mxu0 0
    %2336 = vmatpush1.bf16.msra.mxu0 %v2112
    %2337 = vmatprep.subr.bf16.mxu0 0
    %2338 = vmatpush2.bf16.msra.mxu0 %v2127
    %2339 = vmatprep.subr.bf16.mxu0 0
    %2340 = vmatpush2.bf16.msra.mxu0 %v2126
    %2341 = vmatprep.subr.bf16.mxu0 0
    %2342 = vmatpush2.bf16.msra.mxu0 %v2125
    %2343 = vmatprep.subr.bf16.mxu0 0
    %2344 = vmatpush2.bf16.msra.mxu0 %v2124
    %2345 = vmatprep.subr.bf16.mxu0 0
    %2346 = vmatpush2.bf16.msra.mxu0 %v2123
    %2347 = vmatprep.subr.bf16.mxu0 0
    %2348 = vmatpush2.bf16.msra.mxu0 %v2122
    %2349 = vmatprep.subr.bf16.mxu0 0
    %2350 = vmatpush2.bf16.msra.mxu0 %v2121
    %2351 = vmatprep.subr.bf16.mxu0 0
    %2352 = vmatpush2.bf16.msra.mxu0 %v2120
    %2353 = vmatprep.mubr.bf16.mxu0 %v1644
    %2354 = vmatmul.mubr.bf16.gmra.mxu0 %v1643
    %v2355 = vpop.f32.mrf.mxu0
    %v2356 = vadd.f32 %v2259, %v2355
    %v2357 = vpop.f32.mrf.mxu0
    %v2358 = vpop.f32.mrf.mxu0
    %v2359 = vadd.f32 %v2262, %v2358
    %v2360 = vpop.f32.mrf.mxu0
    %2361 = vmatprep.mubr.bf16.mxu0 %v1652
    %2362 = vmatmul.mubr.bf16.gmra.mxu0 %v1651
    %v2363 = vpop.f32.mrf.mxu0
    %v2364 = vadd.f32 %v2267, %v2363
    %v2365 = vpop.f32.mrf.mxu0
    %v2366 = vpop.f32.mrf.mxu0
    %v2367 = vadd.f32 %v2270, %v2366
    %v2368 = vpop.f32.mrf.mxu0
    %2369 = vmatprep.mubr.bf16.mxu0 %v1660
    %2370 = vmatmul.mubr.bf16.gmra.mxu0 %v1659
    %v2371 = vpop.f32.mrf.mxu0
    %v2372 = vadd.f32 %v2275, %v2371
    %v2373 = vpop.f32.mrf.mxu0
    %v2374 = vpop.f32.mrf.mxu0
    %v2375 = vadd.f32 %v2278, %v2374
    %v2376 = vpop.f32.mrf.mxu0
    %2377 = vmatprep.mubr.bf16.mxu0 %v1668
    %2378 = vmatmul.mubr.bf16.gmra.mxu0 %v1667
    %v2379 = vpop.f32.mrf.mxu0
    %v2380 = vadd.f32 %v2283, %v2379
    %v2381 = vpop.f32.mrf.mxu0
    %v2382 = vpop.f32.mrf.mxu0
    %v2383 = vadd.f32 %v2286, %v2382
    %v2384 = vpop.f32.mrf.mxu0
    %2385 = vmatprep.mubr.bf16.mxu0 %v1676
    %2386 = vmatmul.mubr.bf16.gmra.mxu0 %v1675
    %v2387 = vpop.f32.mrf.mxu0
    %v2388 = vadd.f32 %v2291, %v2387
    %v2389 = vpop.f32.mrf.mxu0
    %v2390 = vpop.f32.mrf.mxu0
    %v2391 = vadd.f32 %v2294, %v2390
    %v2392 = vpop.f32.mrf.mxu0
    %2393 = vmatprep.mubr.bf16.mxu0 %v1684
    %2394 = vmatmul.mubr.bf16.gmra.mxu0 %v1683
    %v2395 = vpop.f32.mrf.mxu0
    %v2396 = vadd.f32 %v2299, %v2395
    %v2397 = vpop.f32.mrf.mxu0
    %v2398 = vpop.f32.mrf.mxu0
    %v2399 = vadd.f32 %v2302, %v2398
    %v2400 = vpop.f32.mrf.mxu0
    %2401 = vmatprep.mubr.bf16.mxu0 %v1692
    %2402 = vmatmul.mubr.bf16.gmra.mxu0 %v1691
    %v2403 = vpop.f32.mrf.mxu0
    %v2404 = vadd.f32 %v2307, %v2403
    %v2405 = vpop.f32.mrf.mxu0
    %v2406 = vpop.f32.mrf.mxu0
    %v2407 = vadd.f32 %v2310, %v2406
    %v2408 = vpop.f32.mrf.mxu0
    %2409 = vmatprep.mubr.bf16.mxu0 %v1700
    %2410 = vmatmul.mubr.bf16.gmra.mxu0 %v1699
    %v2411 = vpop.f32.mrf.mxu0
    %v2412 = vadd.f32 %v2315, %v2411
    %v2413 = vpop.f32.mrf.mxu0
    %v2414 = vpop.f32.mrf.mxu0
    %v2415 = vadd.f32 %v2318, %v2414
    %v2416 = vpop.f32.mrf.mxu0
    %2417 = vdwg.mxu0
    %2418 = vmatprep.subr.bf16.mxu0 0
    %2419 = vmatpush1.bf16.msra.mxu0 %v2135
    %2420 = vmatprep.subr.bf16.mxu0 0
    %2421 = vmatpush1.bf16.msra.mxu0 %v2134
    %2422 = vmatprep.subr.bf16.mxu0 0
    %2423 = vmatpush1.bf16.msra.mxu0 %v2133
    %2424 = vmatprep.subr.bf16.mxu0 0
    %2425 = vmatpush1.bf16.msra.mxu0 %v2132
    %2426 = vmatprep.subr.bf16.mxu0 0
    %2427 = vmatpush1.bf16.msra.mxu0 %v2131
    %2428 = vmatprep.subr.bf16.mxu0 0
    %2429 = vmatpush1.bf16.msra.mxu0 %v2130
    %2430 = vmatprep.subr.bf16.mxu0 0
    %2431 = vmatpush1.bf16.msra.mxu0 %v2129
    %2432 = vmatprep.subr.bf16.mxu0 0
    %2433 = vmatpush1.bf16.msra.mxu0 %v2128
    %2434 = vmatprep.subr.bf16.mxu0 0
    %2435 = vmatpush2.bf16.msra.mxu0 %v2143
    %2436 = vmatprep.subr.bf16.mxu0 0
    %2437 = vmatpush2.bf16.msra.mxu0 %v2142
    %2438 = vmatprep.subr.bf16.mxu0 0
    %2439 = vmatpush2.bf16.msra.mxu0 %v2141
    %2440 = vmatprep.subr.bf16.mxu0 0
    %2441 = vmatpush2.bf16.msra.mxu0 %v2140
    %2442 = vmatprep.subr.bf16.mxu0 0
    %2443 = vmatpush2.bf16.msra.mxu0 %v2139
    %2444 = vmatprep.subr.bf16.mxu0 0
    %2445 = vmatpush2.bf16.msra.mxu0 %v2138
    %2446 = vmatprep.subr.bf16.mxu0 0
    %2447 = vmatpush2.bf16.msra.mxu0 %v2137
    %2448 = vmatprep.subr.bf16.mxu0 0
    %2449 = vmatpush2.bf16.msra.mxu0 %v2136
    %2450 = vmatprep.mubr.bf16.mxu0 %v1646
    %2451 = vmatmul.mubr.bf16.gmra.mxu0 %v1645
    %v2452 = vpop.f32.mrf.mxu0
    %v2453 = vadd.f32 %v2356, %v2452
    %v2454 = vpop.f32.mrf.mxu0
    %v2455 = vpop.f32.mrf.mxu0
    %v2456 = vadd.f32 %v2359, %v2455
    %v2457 = vpop.f32.mrf.mxu0
    %2458 = vmatprep.mubr.bf16.mxu0 %v1654
    %2459 = vmatmul.mubr.bf16.gmra.mxu0 %v1653
    %v2460 = vpop.f32.mrf.mxu0
    %v2461 = vadd.f32 %v2364, %v2460
    %v2462 = vpop.f32.mrf.mxu0
    %v2463 = vpop.f32.mrf.mxu0
    %v2464 = vadd.f32 %v2367, %v2463
    %v2465 = vpop.f32.mrf.mxu0
    %2466 = vmatprep.mubr.bf16.mxu0 %v1662
    %2467 = vmatmul.mubr.bf16.gmra.mxu0 %v1661
    %v2468 = vpop.f32.mrf.mxu0
    %v2469 = vadd.f32 %v2372, %v2468
    %v2470 = vpop.f32.mrf.mxu0
    %v2471 = vpop.f32.mrf.mxu0
    %v2472 = vadd.f32 %v2375, %v2471
    %v2473 = vpop.f32.mrf.mxu0
    %2474 = vmatprep.mubr.bf16.mxu0 %v1670
    %2475 = vmatmul.mubr.bf16.gmra.mxu0 %v1669
    %v2476 = vpop.f32.mrf.mxu0
    %v2477 = vadd.f32 %v2380, %v2476
    %v2478 = vpop.f32.mrf.mxu0
    %v2479 = vpop.f32.mrf.mxu0
    %v2480 = vadd.f32 %v2383, %v2479
    %v2481 = vpop.f32.mrf.mxu0
    %2482 = vmatprep.mubr.bf16.mxu0 %v1678
    %2483 = vmatmul.mubr.bf16.gmra.mxu0 %v1677
    %v2484 = vpop.f32.mrf.mxu0
    %v2485 = vadd.f32 %v2388, %v2484
    %v2486 = vpop.f32.mrf.mxu0
    %v2487 = vpop.f32.mrf.mxu0
    %v2488 = vadd.f32 %v2391, %v2487
    %v2489 = vpop.f32.mrf.mxu0
    %2490 = vmatprep.mubr.bf16.mxu0 %v1686
    %2491 = vmatmul.mubr.bf16.gmra.mxu0 %v1685
    %v2492 = vpop.f32.mrf.mxu0
    %v2493 = vadd.f32 %v2396, %v2492
    %v2494 = vpop.f32.mrf.mxu0
    %v2495 = vpop.f32.mrf.mxu0
    %v2496 = vadd.f32 %v2399, %v2495
    %v2497 = vpop.f32.mrf.mxu0
    %2498 = vmatprep.mubr.bf16.mxu0 %v1694
    %2499 = vmatmul.mubr.bf16.gmra.mxu0 %v1693
    %v2500 = vpop.f32.mrf.mxu0
    %v2501 = vadd.f32 %v2404, %v2500
    %v2502 = vpop.f32.mrf.mxu0
    %v2503 = vpop.f32.mrf.mxu0
    %v2504 = vadd.f32 %v2407, %v2503
    %v2505 = vpop.f32.mrf.mxu0
    %2506 = vmatprep.mubr.bf16.mxu0 %v1702
    %2507 = vmatmul.mubr.bf16.gmra.mxu0 %v1701
    %v2508 = vpop.f32.mrf.mxu0
    %v2509 = vadd.f32 %v2412, %v2508
    %v2510 = vpop.f32.mrf.mxu0
    %v2511 = vpop.f32.mrf.mxu0
    %v2512 = vadd.f32 %v2415, %v2511
    %v2513 = vpop.f32.mrf.mxu0
    %2514 = vdwg.mxu0
    %2515 = vmatprep.subr.bf16.mxu0 0
    %2516 = vmatpush1.bf16.msra.mxu0 %v2151
    %2517 = vmatprep.subr.bf16.mxu0 0
    %2518 = vmatpush1.bf16.msra.mxu0 %v2150
    %2519 = vmatprep.subr.bf16.mxu0 0
    %2520 = vmatpush1.bf16.msra.mxu0 %v2149
    %2521 = vmatprep.subr.bf16.mxu0 0
    %2522 = vmatpush1.bf16.msra.mxu0 %v2148
    %2523 = vmatprep.subr.bf16.mxu0 0
    %2524 = vmatpush1.bf16.msra.mxu0 %v2147
    %2525 = vmatprep.subr.bf16.mxu0 0
    %2526 = vmatpush1.bf16.msra.mxu0 %v2146
    %2527 = vmatprep.subr.bf16.mxu0 0
    %2528 = vmatpush1.bf16.msra.mxu0 %v2145
    %2529 = vmatprep.subr.bf16.mxu0 0
    %2530 = vmatpush1.bf16.msra.mxu0 %v2144
    %2531 = vmatprep.subr.bf16.mxu0 0
    %2532 = vmatpush2.bf16.msra.mxu0 %v2159
    %2533 = vmatprep.subr.bf16.mxu0 0
    %2534 = vmatpush2.bf16.msra.mxu0 %v2158
    %2535 = vmatprep.subr.bf16.mxu0 0
    %2536 = vmatpush2.bf16.msra.mxu0 %v2157
    %2537 = vmatprep.subr.bf16.mxu0 0
    %2538 = vmatpush2.bf16.msra.mxu0 %v2156
    %2539 = vmatprep.subr.bf16.mxu0 0
    %2540 = vmatpush2.bf16.msra.mxu0 %v2155
    %2541 = vmatprep.subr.bf16.mxu0 0
    %2542 = vmatpush2.bf16.msra.mxu0 %v2154
    %2543 = vmatprep.subr.bf16.mxu0 0
    %2544 = vmatpush2.bf16.msra.mxu0 %v2153
    %2545 = vmatprep.subr.bf16.mxu0 0
    %2546 = vmatpush2.bf16.msra.mxu0 %v2152
    %2547 = vmatprep.mubr.bf16.mxu0 %v1648
    %2548 = vmatmul.mubr.bf16.gmra.mxu0 %v1647
    %v2549 = vpop.f32.mrf.mxu0
    %v2550 = vadd.f32 %v2453, %v2549
    %v2551 = vpop.f32.mrf.mxu0
    %v2552 = vpop.f32.mrf.mxu0
    %v2553 = vadd.f32 %v2456, %v2552
    %v2554 = vpop.f32.mrf.mxu0
    %2555 = vmatprep.mubr.bf16.mxu0 %v1656
    %2556 = vmatmul.mubr.bf16.gmra.mxu0 %v1655
    %v2557 = vpop.f32.mrf.mxu0
    %v2558 = vadd.f32 %v2461, %v2557
    %v2559 = vpop.f32.mrf.mxu0
    %v2560 = vpop.f32.mrf.mxu0
    %v2561 = vadd.f32 %v2464, %v2560
    %v2562 = vpop.f32.mrf.mxu0
    %2563 = vmatprep.mubr.bf16.mxu0 %v1664
    %2564 = vmatmul.mubr.bf16.gmra.mxu0 %v1663
    %v2565 = vpop.f32.mrf.mxu0
    %v2566 = vadd.f32 %v2469, %v2565
    %v2567 = vpop.f32.mrf.mxu0
    %v2568 = vpop.f32.mrf.mxu0
    %v2569 = vadd.f32 %v2472, %v2568
    %v2570 = vpop.f32.mrf.mxu0
    %2571 = vmatprep.mubr.bf16.mxu0 %v1672
    %2572 = vmatmul.mubr.bf16.gmra.mxu0 %v1671
    %v2573 = vpop.f32.mrf.mxu0
    %v2574 = vadd.f32 %v2477, %v2573
    %v2575 = vpop.f32.mrf.mxu0
    %v2576 = vpop.f32.mrf.mxu0
    %v2577 = vadd.f32 %v2480, %v2576
    %v2578 = vpop.f32.mrf.mxu0
    %2579 = vmatprep.mubr.bf16.mxu0 %v1680
    %2580 = vmatmul.mubr.bf16.gmra.mxu0 %v1679
    %v2581 = vpop.f32.mrf.mxu0
    %v2582 = vadd.f32 %v2485, %v2581
    %v2583 = vpop.f32.mrf.mxu0
    %v2584 = vpop.f32.mrf.mxu0
    %v2585 = vadd.f32 %v2488, %v2584
    %v2586 = vpop.f32.mrf.mxu0
    %2587 = vmatprep.mubr.bf16.mxu0 %v1688
    %2588 = vmatmul.mubr.bf16.gmra.mxu0 %v1687
    %v2589 = vpop.f32.mrf.mxu0
    %v2590 = vadd.f32 %v2493, %v2589
    %v2591 = vpop.f32.mrf.mxu0
    %v2592 = vpop.f32.mrf.mxu0
    %v2593 = vadd.f32 %v2496, %v2592
    %v2594 = vpop.f32.mrf.mxu0
    %2595 = vmatprep.mubr.bf16.mxu0 %v1696
    %2596 = vmatmul.mubr.bf16.gmra.mxu0 %v1695
    %v2597 = vpop.f32.mrf.mxu0
    %v2598 = vadd.f32 %v2501, %v2597
    %v2599 = vpop.f32.mrf.mxu0
    %v2600 = vpop.f32.mrf.mxu0
    %v2601 = vadd.f32 %v2504, %v2600
    %v2602 = vpop.f32.mrf.mxu0
    %2603 = vmatprep.mubr.bf16.mxu0 %v1704
    %2604 = vmatmul.mubr.bf16.gmra.mxu0 %v1703
    %v2605 = vpop.f32.mrf.mxu0
    %v2606 = vadd.f32 %v2509, %v2605
    %v2607 = vpop.f32.mrf.mxu0
    %v2608 = vpop.f32.mrf.mxu0
    %v2609 = vadd.f32 %v2512, %v2608
    %v2610 = vpop.f32.mrf.mxu0
    %2611 = vdwg.mxu0
    %vm2612 = vcmp.ge.f32.partialorder %v2550, 0.0
    %vm2613 = vcmp.ge.f32.partialorder %v2553, 0.0
    %vm2614 = vcmp.ge.f32.partialorder %v2558, 0.0
    %vm2615 = vcmp.ge.f32.partialorder %v2561, 0.0
    %vm2616 = vcmp.ge.f32.partialorder %v2566, 0.0
    %vm2617 = vcmp.ge.f32.partialorder %v2569, 0.0
    %vm2618 = vcmp.ge.f32.partialorder %v2574, 0.0
    %vm2619 = vcmp.ge.f32.partialorder %v2577, 0.0
    %vm2620 = vcmp.ge.f32.partialorder %v2582, 0.0
    %vm2621 = vcmp.ge.f32.partialorder %v2585, 0.0
    %vm2622 = vcmp.ge.f32.partialorder %v2590, 0.0
    %vm2623 = vcmp.ge.f32.partialorder %v2593, 0.0
    %vm2624 = vcmp.ge.f32.partialorder %v2598, 0.0
    %vm2625 = vcmp.ge.f32.partialorder %v2601, 0.0
    %vm2626 = vcmp.ge.f32.partialorder %v2606, 0.0
    %vm2627 = vcmp.ge.f32.partialorder %v2609, 0.0
    %v2628 = vmul.f32 %v2550, 0.2
    %v2629 = vmul.f32 %v2553, 0.2
    %v2630 = vmul.f32 %v2558, 0.2
    %v2631 = vmul.f32 %v2561, 0.2
    %v2632 = vmul.f32 %v2566, 0.2
    %v2633 = vmul.f32 %v2569, 0.2
    %v2634 = vmul.f32 %v2574, 0.2
    %v2635 = vmul.f32 %v2577, 0.2
    %v2636 = vmul.f32 %v2582, 0.2
    %v2637 = vmul.f32 %v2585, 0.2
    %v2638 = vmul.f32 %v2590, 0.2
    %v2639 = vmul.f32 %v2593, 0.2
    %v2640 = vmul.f32 %v2598, 0.2
    %v2641 = vmul.f32 %v2601, 0.2
    %v2642 = vmul.f32 %v2606, 0.2
    %v2643 = vmul.f32 %v2609, 0.2
    %v2644 = vsel %vm2612, %v2550, %v2628
    %v2645 = vsel %vm2613, %v2553, %v2629
    %v2646 = vsel %vm2614, %v2558, %v2630
    %v2647 = vsel %vm2615, %v2561, %v2631
    %v2648 = vsel %vm2616, %v2566, %v2632
    %v2649 = vsel %vm2617, %v2569, %v2633
    %v2650 = vsel %vm2618, %v2574, %v2634
    %v2651 = vsel %vm2619, %v2577, %v2635
    %v2652 = vsel %vm2620, %v2582, %v2636
    %v2653 = vsel %vm2621, %v2585, %v2637
    %v2654 = vsel %vm2622, %v2590, %v2638
    %v2655 = vsel %vm2623, %v2593, %v2639
    %v2656 = vsel %vm2624, %v2598, %v2640
    %v2657 = vsel %vm2625, %v2601, %v2641
    %v2658 = vsel %vm2626, %v2606, %v2642
    %v2659 = vsel %vm2627, %v2609, %v2643
    %v2660 = vpack.c.bf16 %v2645, %v2644
    %v2661 = vpack.c.bf16 %v2647, %v2646
    %v2662 = vpack.c.bf16 %v2649, %v2648
    %v2663 = vpack.c.bf16 %v2651, %v2650
    %v2664 = vpack.c.bf16 %v2653, %v2652
    %v2665 = vpack.c.bf16 %v2655, %v2654
    %v2666 = vpack.c.bf16 %v2657, %v2656
    %v2667 = vpack.c.bf16 %v2659, %v2658
    %v2668 = vld [vmem:[#allocation7] sm:$0xf]
    %v2669 = vld [vmem:[#allocation7 + $0x4] sm:$0xf]
    %v2670 = vld [vmem:[#allocation7 + $0x8] sm:$0xf]
    %v2671 = vld [vmem:[#allocation7 + $0xc] sm:$0xf]
    %v2672 = vld [vmem:[#allocation7 + $0x10] sm:$0xf]
    %v2673 = vld [vmem:[#allocation7 + $0x14] sm:$0xf]
    %v2674 = vld [vmem:[#allocation7 + $0x18] sm:$0xf]
    %v2675 = vld [vmem:[#allocation7 + $0x1c] sm:$0xf]
    %v2676 = vld [vmem:[#allocation7 + $0x20] sm:$0xf]
    %v2677 = vld [vmem:[#allocation7 + $0x24] sm:$0xf]
    %v2678 = vld [vmem:[#allocation7 + $0x28] sm:$0xf]
    %v2679 = vld [vmem:[#allocation7 + $0x2c] sm:$0xf]
    %v2680 = vld [vmem:[#allocation7 + $0x30] sm:$0xf]
    %v2681 = vld [vmem:[#allocation7 + $0x34] sm:$0xf]
    %v2682 = vld [vmem:[#allocation7 + $0x38] sm:$0xf]
    %v2683 = vld [vmem:[#allocation7 + $0x3c] sm:$0xf]
    %v2684 = vld [vmem:[%s4] sm:$0x1]
    %v2686 = vlaneseq
    %v2687 = vshrl.u32 %v2686, 7
    %v2688 = vsub.s32 0, %v2687
    %v2689 = vrot.slane %v2684, %v2688
    %v2707 = vunpack.c.l.b16 %v2668
    %v2708 = vunpack.c.l.b16 %v2669
    %v2709 = vunpack.c.l.b16 %v2670
    %v2710 = vunpack.c.l.b16 %v2671
    %v2711 = vunpack.c.l.b16 %v2672
    %v2712 = vunpack.c.l.b16 %v2673
    %v2713 = vunpack.c.l.b16 %v2674
    %v2714 = vunpack.c.l.b16 %v2675
    %v2715 = vunpack.c.l.b16 %v2676
    %v2716 = vunpack.c.l.b16 %v2677
    %v2717 = vunpack.c.l.b16 %v2678
    %v2718 = vunpack.c.l.b16 %v2679
    %v2719 = vunpack.c.l.b16 %v2680
    %v2720 = vunpack.c.l.b16 %v2681
    %v2721 = vunpack.c.l.b16 %v2682
    %v2722 = vunpack.c.l.b16 %v2683
    %v2723 = vpack.c.b16 %v2708, %v2707
    %v2724 = vpack.c.b16 %v2710, %v2709
    %v2725 = vpack.c.b16 %v2712, %v2711
    %v2726 = vpack.c.b16 %v2714, %v2713
    %v2727 = vpack.c.b16 %v2716, %v2715
    %v2728 = vpack.c.b16 %v2718, %v2717
    %v2729 = vpack.c.b16 %v2720, %v2719
    %v2730 = vpack.c.b16 %v2722, %v2721
    %2739 = vmatprep.subr.bf16.mxu0 0
    %2740 = vmatpush1.bf16.msra.mxu0 %v2730
    %2741 = vmatprep.subr.bf16.mxu0 0
    %2742 = vmatpush1.bf16.msra.mxu0 %v2729
    %2743 = vmatprep.subr.bf16.mxu0 0
    %2744 = vmatpush1.bf16.msra.mxu0 %v2728
    %2745 = vmatprep.subr.bf16.mxu0 0
    %2746 = vmatpush1.bf16.msra.mxu0 %v2727
    %2747 = vmatprep.subr.bf16.mxu0 0
    %2748 = vmatpush1.bf16.msra.mxu0 %v2726
    %2749 = vmatprep.subr.bf16.mxu0 0
    %2750 = vmatpush1.bf16.msra.mxu0 %v2725
    %2751 = vmatprep.subr.bf16.mxu0 0
    %2752 = vmatpush1.bf16.msra.mxu0 %v2724
    %2753 = vmatprep.subr.bf16.mxu0 0
    %2754 = vmatpush1.bf16.msra.mxu0 %v2723
    %2755 = vmatprep.subr.bf16.mxu0 0
    %2756 = vmatpush2.bf16.msra.mxu0 0
    %2757 = vmatprep.subr.bf16.mxu0 0
    %2758 = vmatpush2.bf16.msra.mxu0 0
    %2759 = vmatprep.subr.bf16.mxu0 0
    %2760 = vmatpush2.bf16.msra.mxu0 0
    %2761 = vmatprep.subr.bf16.mxu0 0
    %2762 = vmatpush2.bf16.msra.mxu0 0
    %2763 = vmatprep.subr.bf16.mxu0 0
    %2764 = vmatpush2.bf16.msra.mxu0 0
    %2765 = vmatprep.subr.bf16.mxu0 0
    %2766 = vmatpush2.bf16.msra.mxu0 0
    %2767 = vmatprep.subr.bf16.mxu0 0
    %2768 = vmatpush2.bf16.msra.mxu0 0
    %2769 = vmatprep.subr.bf16.mxu0 0
    %2770 = vmatpush2.bf16.msra.mxu0 0
    %2771 = vmatprep.mubr.bf16.mxu0 0
    %2772 = vmatmul.mubr.bf16.gmra.mxu0 %v2660
    %v2773 = vpop.f32.mrf.mxu0
    %v2774 = vadd.f32 %v2689, %v2773
    %v2775 = vpop.f32.mrf.mxu0
    %v2776 = vpop.f32.mrf.mxu0
    %v2777 = vadd.f32 %v2689, %v2776
    %v2778 = vpop.f32.mrf.mxu0
    %2779 = vmatprep.mubr.bf16.mxu0 0
    %2780 = vmatmul.mubr.bf16.gmra.mxu0 %v2661
    %v2781 = vpop.f32.mrf.mxu0
    %v2782 = vadd.f32 %v2689, %v2781
    %v2783 = vpop.f32.mrf.mxu0
    %v2784 = vpop.f32.mrf.mxu0
    %v2785 = vadd.f32 %v2689, %v2784
    %v2786 = vpop.f32.mrf.mxu0
    %2787 = vmatprep.mubr.bf16.mxu0 0
    %2788 = vmatmul.mubr.bf16.gmra.mxu0 %v2662
    %v2789 = vpop.f32.mrf.mxu0
    %v2790 = vadd.f32 %v2689, %v2789
    %v2791 = vpop.f32.mrf.mxu0
    %v2792 = vpop.f32.mrf.mxu0
    %v2793 = vadd.f32 %v2689, %v2792
    %v2794 = vpop.f32.mrf.mxu0
    %2795 = vmatprep.mubr.bf16.mxu0 0
    %2796 = vmatmul.mubr.bf16.gmra.mxu0 %v2663
    %v2797 = vpop.f32.mrf.mxu0
    %v2798 = vadd.f32 %v2689, %v2797
    %v2799 = vpop.f32.mrf.mxu0
    %v2800 = vpop.f32.mrf.mxu0
    %v2801 = vadd.f32 %v2689, %v2800
    %v2802 = vpop.f32.mrf.mxu0
    %2803 = vmatprep.mubr.bf16.mxu0 0
    %2804 = vmatmul.mubr.bf16.gmra.mxu0 %v2664
    %v2805 = vpop.f32.mrf.mxu0
    %v2806 = vadd.f32 %v2689, %v2805
    %v2807 = vpop.f32.mrf.mxu0
    %v2808 = vpop.f32.mrf.mxu0
    %v2809 = vadd.f32 %v2689, %v2808
    %v2810 = vpop.f32.mrf.mxu0
    %2811 = vmatprep.mubr.bf16.mxu0 0
    %2812 = vmatmul.mubr.bf16.gmra.mxu0 %v2665
    %v2813 = vpop.f32.mrf.mxu0
    %v2814 = vadd.f32 %v2689, %v2813
    %v2815 = vpop.f32.mrf.mxu0
    %v2816 = vpop.f32.mrf.mxu0
    %v2817 = vadd.f32 %v2689, %v2816
    %v2818 = vpop.f32.mrf.mxu0
    %2819 = vmatprep.mubr.bf16.mxu0 0
    %2820 = vmatmul.mubr.bf16.gmra.mxu0 %v2666
    %v2821 = vpop.f32.mrf.mxu0
    %v2822 = vadd.f32 %v2689, %v2821
    %v2823 = vpop.f32.mrf.mxu0
    %v2824 = vpop.f32.mrf.mxu0
    %v2825 = vadd.f32 %v2689, %v2824
    %v2826 = vpop.f32.mrf.mxu0
    %2827 = vmatprep.mubr.bf16.mxu0 0
    %2828 = vmatmul.mubr.bf16.gmra.mxu0 %v2667
    %v2829 = vpop.f32.mrf.mxu0
    %v2830 = vadd.f32 %v2689, %v2829
    %v2831 = vpop.f32.mrf.mxu0
    %v2832 = vpop.f32.mrf.mxu0
    %v2833 = vadd.f32 %v2689, %v2832
    %v2834 = vpop.f32.mrf.mxu0
    %2835 = vdwg.mxu0
    %vm2836 = vcmp.ge.f32.partialorder %v2774, 0.0
    %vm2837 = vcmp.ge.f32.partialorder %v2777, 0.0
    %vm2838 = vcmp.ge.f32.partialorder %v2782, 0.0
    %vm2839 = vcmp.ge.f32.partialorder %v2785, 0.0
    %vm2840 = vcmp.ge.f32.partialorder %v2790, 0.0
    %vm2841 = vcmp.ge.f32.partialorder %v2793, 0.0
    %vm2842 = vcmp.ge.f32.partialorder %v2798, 0.0
    %vm2843 = vcmp.ge.f32.partialorder %v2801, 0.0
    %vm2844 = vcmp.ge.f32.partialorder %v2806, 0.0
    %vm2845 = vcmp.ge.f32.partialorder %v2809, 0.0
    %vm2846 = vcmp.ge.f32.partialorder %v2814, 0.0
    %vm2847 = vcmp.ge.f32.partialorder %v2817, 0.0
    %vm2848 = vcmp.ge.f32.partialorder %v2822, 0.0
    %vm2849 = vcmp.ge.f32.partialorder %v2825, 0.0
    %vm2850 = vcmp.ge.f32.partialorder %v2830, 0.0
    %vm2851 = vcmp.ge.f32.partialorder %v2833, 0.0
    %v2852 = vmul.f32 %v2774, 0.2
    %v2853 = vmul.f32 %v2777, 0.2
    %v2854 = vmul.f32 %v2782, 0.2
    %v2855 = vmul.f32 %v2785, 0.2
    %v2856 = vmul.f32 %v2790, 0.2
    %v2857 = vmul.f32 %v2793, 0.2
    %v2858 = vmul.f32 %v2798, 0.2
    %v2859 = vmul.f32 %v2801, 0.2
    %v2860 = vmul.f32 %v2806, 0.2
    %v2861 = vmul.f32 %v2809, 0.2
    %v2862 = vmul.f32 %v2814, 0.2
    %v2863 = vmul.f32 %v2817, 0.2
    %v2864 = vmul.f32 %v2822, 0.2
    %v2865 = vmul.f32 %v2825, 0.2
    %v2866 = vmul.f32 %v2830, 0.2
    %v2867 = vmul.f32 %v2833, 0.2
    %v2868 = vsel %vm2836, %v2774, %v2852
    %v2869 = vsel %vm2837, %v2777, %v2853
    %v2870 = vsel %vm2838, %v2782, %v2854
    %v2871 = vsel %vm2839, %v2785, %v2855
    %v2872 = vsel %vm2840, %v2790, %v2856
    %v2873 = vsel %vm2841, %v2793, %v2857
    %v2874 = vsel %vm2842, %v2798, %v2858
    %v2875 = vsel %vm2843, %v2801, %v2859
    %v2876 = vsel %vm2844, %v2806, %v2860
    %v2877 = vsel %vm2845, %v2809, %v2861
    %v2878 = vsel %vm2846, %v2814, %v2862
    %v2879 = vsel %vm2847, %v2817, %v2863
    %v2880 = vsel %vm2848, %v2822, %v2864
    %v2881 = vsel %vm2849, %v2825, %v2865
    %v2882 = vsel %vm2850, %v2830, %v2866
    %v2883 = vsel %vm2851, %v2833, %v2867
    %v2884 = vpack.c.bf16 %v2869, %v2868
    %v2885 = vpack.c.bf16 %v2871, %v2870
    %v2886 = vpack.c.bf16 %v2873, %v2872
    %v2887 = vpack.c.bf16 %v2875, %v2874
    %v2888 = vpack.c.bf16 %v2877, %v2876
    %v2889 = vpack.c.bf16 %v2879, %v2878
    %v2890 = vpack.c.bf16 %v2881, %v2880
    %v2891 = vpack.c.bf16 %v2883, %v2882
    %v2892 = vld [vmem:[#allocation8] sm:$0xf]
    %v2893 = vld [vmem:[#allocation8 + $0x4] sm:$0xf]
    %v2894 = vld [vmem:[#allocation8 + $0x8] sm:$0xf]
    %v2895 = vld [vmem:[#allocation8 + $0xc] sm:$0xf]
    %v2896 = vld [vmem:[#allocation8 + $0x10] sm:$0xf]
    %v2897 = vld [vmem:[#allocation8 + $0x14] sm:$0xf]
    %v2898 = vld [vmem:[#allocation8 + $0x18] sm:$0xf]
    %v2899 = vld [vmem:[#allocation8 + $0x1c] sm:$0xf]
    %v2900 = vld [vmem:[#allocation8 + $0x20] sm:$0xf]
    %v2901 = vld [vmem:[#allocation8 + $0x24] sm:$0xf]
    %v2902 = vld [vmem:[#allocation8 + $0x28] sm:$0xf]
    %v2903 = vld [vmem:[#allocation8 + $0x2c] sm:$0xf]
    %v2904 = vld [vmem:[#allocation8 + $0x30] sm:$0xf]
    %v2905 = vld [vmem:[#allocation8 + $0x34] sm:$0xf]
    %v2906 = vld [vmem:[#allocation8 + $0x38] sm:$0xf]
    %v2907 = vld [vmem:[#allocation8 + $0x3c] sm:$0xf]
    %v2908 = vld [vmem:[%s6] sm:$0x1]
    %v2910 = vlaneseq
    %v2911 = vshrl.u32 %v2910, 7
    %v2912 = vsub.s32 0, %v2911
    %v2913 = vrot.slane %v2908, %v2912
    %v2931 = vunpack.c.l.b16 %v2892
    %v2932 = vunpack.c.l.b16 %v2893
    %v2933 = vunpack.c.l.b16 %v2894
    %v2934 = vunpack.c.l.b16 %v2895
    %v2935 = vunpack.c.l.b16 %v2896
    %v2936 = vunpack.c.l.b16 %v2897
    %v2937 = vunpack.c.l.b16 %v2898
    %v2938 = vunpack.c.l.b16 %v2899
    %v2939 = vunpack.c.l.b16 %v2900
    %v2940 = vunpack.c.l.b16 %v2901
    %v2941 = vunpack.c.l.b16 %v2902
    %v2942 = vunpack.c.l.b16 %v2903
    %v2943 = vunpack.c.l.b16 %v2904
    %v2944 = vunpack.c.l.b16 %v2905
    %v2945 = vunpack.c.l.b16 %v2906
    %v2946 = vunpack.c.l.b16 %v2907
    %v2947 = vpack.c.b16 %v2932, %v2931
    %v2948 = vpack.c.b16 %v2934, %v2933
    %v2949 = vpack.c.b16 %v2936, %v2935
    %v2950 = vpack.c.b16 %v2938, %v2937
    %v2951 = vpack.c.b16 %v2940, %v2939
    %v2952 = vpack.c.b16 %v2942, %v2941
    %v2953 = vpack.c.b16 %v2944, %v2943
    %v2954 = vpack.c.b16 %v2946, %v2945
    %2963 = vmatprep.subr.bf16.mxu0 0
    %2964 = vmatpush1.bf16.msra.mxu0 %v2954
    %2965 = vmatprep.subr.bf16.mxu0 0
    %2966 = vmatpush1.bf16.msra.mxu0 %v2953
    %2967 = vmatprep.subr.bf16.mxu0 0
    %2968 = vmatpush1.bf16.msra.mxu0 %v2952
    %2969 = vmatprep.subr.bf16.mxu0 0
    %2970 = vmatpush1.bf16.msra.mxu0 %v2951
    %2971 = vmatprep.subr.bf16.mxu0 0
    %2972 = vmatpush1.bf16.msra.mxu0 %v2950
    %2973 = vmatprep.subr.bf16.mxu0 0
    %2974 = vmatpush1.bf16.msra.mxu0 %v2949
    %2975 = vmatprep.subr.bf16.mxu0 0
    %2976 = vmatpush1.bf16.msra.mxu0 %v2948
    %2977 = vmatprep.subr.bf16.mxu0 0
    %2978 = vmatpush1.bf16.msra.mxu0 %v2947
    %2979 = vmatprep.subr.bf16.mxu0 0
    %2980 = vmatpush2.bf16.msra.mxu0 0
    %2981 = vmatprep.subr.bf16.mxu0 0
    %2982 = vmatpush2.bf16.msra.mxu0 0
    %2983 = vmatprep.subr.bf16.mxu0 0
    %2984 = vmatpush2.bf16.msra.mxu0 0
    %2985 = vmatprep.subr.bf16.mxu0 0
    %2986 = vmatpush2.bf16.msra.mxu0 0
    %2987 = vmatprep.subr.bf16.mxu0 0
    %2988 = vmatpush2.bf16.msra.mxu0 0
    %2989 = vmatprep.subr.bf16.mxu0 0
    %2990 = vmatpush2.bf16.msra.mxu0 0
    %2991 = vmatprep.subr.bf16.mxu0 0
    %2992 = vmatpush2.bf16.msra.mxu0 0
    %2993 = vmatprep.subr.bf16.mxu0 0
    %2994 = vmatpush2.bf16.msra.mxu0 0
    %2995 = vmatprep.mubr.bf16.mxu0 0
    %2996 = vmatmul.mubr.bf16.gmra.mxu0 %v2884
    %v2997 = vpop.f32.mrf.mxu0
    %v2998 = vadd.f32 %v2913, %v2997
    %v2999 = vpop.f32.mrf.mxu0
    %v3000 = vpop.f32.mrf.mxu0
    %v3001 = vadd.f32 %v2913, %v3000
    %v3002 = vpop.f32.mrf.mxu0
    %3003 = vmatprep.mubr.bf16.mxu0 0
    %3004 = vmatmul.mubr.bf16.gmra.mxu0 %v2885
    %v3005 = vpop.f32.mrf.mxu0
    %v3006 = vadd.f32 %v2913, %v3005
    %v3007 = vpop.f32.mrf.mxu0
    %v3008 = vpop.f32.mrf.mxu0
    %v3009 = vadd.f32 %v2913, %v3008
    %v3010 = vpop.f32.mrf.mxu0
    %3011 = vmatprep.mubr.bf16.mxu0 0
    %3012 = vmatmul.mubr.bf16.gmra.mxu0 %v2886
    %v3013 = vpop.f32.mrf.mxu0
    %v3014 = vadd.f32 %v2913, %v3013
    %v3015 = vpop.f32.mrf.mxu0
    %v3016 = vpop.f32.mrf.mxu0
    %v3017 = vadd.f32 %v2913, %v3016
    %v3018 = vpop.f32.mrf.mxu0
    %3019 = vmatprep.mubr.bf16.mxu0 0
    %3020 = vmatmul.mubr.bf16.gmra.mxu0 %v2887
    %v3021 = vpop.f32.mrf.mxu0
    %v3022 = vadd.f32 %v2913, %v3021
    %v3023 = vpop.f32.mrf.mxu0
    %v3024 = vpop.f32.mrf.mxu0
    %v3025 = vadd.f32 %v2913, %v3024
    %v3026 = vpop.f32.mrf.mxu0
    %3027 = vmatprep.mubr.bf16.mxu0 0
    %3028 = vmatmul.mubr.bf16.gmra.mxu0 %v2888
    %v3029 = vpop.f32.mrf.mxu0
    %v3030 = vadd.f32 %v2913, %v3029
    %v3031 = vpop.f32.mrf.mxu0
    %v3032 = vpop.f32.mrf.mxu0
    %v3033 = vadd.f32 %v2913, %v3032
    %v3034 = vpop.f32.mrf.mxu0
    %3035 = vmatprep.mubr.bf16.mxu0 0
    %3036 = vmatmul.mubr.bf16.gmra.mxu0 %v2889
    %v3037 = vpop.f32.mrf.mxu0
    %v3038 = vadd.f32 %v2913, %v3037
    %v3039 = vpop.f32.mrf.mxu0
    %v3040 = vpop.f32.mrf.mxu0
    %v3041 = vadd.f32 %v2913, %v3040
    %v3042 = vpop.f32.mrf.mxu0
    %3043 = vmatprep.mubr.bf16.mxu0 0
    %3044 = vmatmul.mubr.bf16.gmra.mxu0 %v2890
    %v3045 = vpop.f32.mrf.mxu0
    %v3046 = vadd.f32 %v2913, %v3045
    %v3047 = vpop.f32.mrf.mxu0
    %v3048 = vpop.f32.mrf.mxu0
    %v3049 = vadd.f32 %v2913, %v3048
    %v3050 = vpop.f32.mrf.mxu0
    %3051 = vmatprep.mubr.bf16.mxu0 0
    %3052 = vmatmul.mubr.bf16.gmra.mxu0 %v2891
    %v3053 = vpop.f32.mrf.mxu0
    %v3054 = vadd.f32 %v2913, %v3053
    %v3055 = vpop.f32.mrf.mxu0
    %v3056 = vpop.f32.mrf.mxu0
    %v3057 = vadd.f32 %v2913, %v3056
    %v3058 = vpop.f32.mrf.mxu0
    %3059 = vdwg.mxu0
    %vm3060 = vcmp.ge.f32.partialorder %v2998, 0.0
    %vm3061 = vcmp.ge.f32.partialorder %v3001, 0.0
    %vm3062 = vcmp.ge.f32.partialorder %v3006, 0.0
    %vm3063 = vcmp.ge.f32.partialorder %v3009, 0.0
    %vm3064 = vcmp.ge.f32.partialorder %v3014, 0.0
    %vm3065 = vcmp.ge.f32.partialorder %v3017, 0.0
    %vm3066 = vcmp.ge.f32.partialorder %v3022, 0.0
    %vm3067 = vcmp.ge.f32.partialorder %v3025, 0.0
    %vm3068 = vcmp.ge.f32.partialorder %v3030, 0.0
    %vm3069 = vcmp.ge.f32.partialorder %v3033, 0.0
    %vm3070 = vcmp.ge.f32.partialorder %v3038, 0.0
    %vm3071 = vcmp.ge.f32.partialorder %v3041, 0.0
    %vm3072 = vcmp.ge.f32.partialorder %v3046, 0.0
    %vm3073 = vcmp.ge.f32.partialorder %v3049, 0.0
    %vm3074 = vcmp.ge.f32.partialorder %v3054, 0.0
    %vm3075 = vcmp.ge.f32.partialorder %v3057, 0.0
    %v3076 = vmul.f32 %v2998, 0.2
    %v3077 = vmul.f32 %v3001, 0.2
    %v3078 = vmul.f32 %v3006, 0.2
    %v3079 = vmul.f32 %v3009, 0.2
    %v3080 = vmul.f32 %v3014, 0.2
    %v3081 = vmul.f32 %v3017, 0.2
    %v3082 = vmul.f32 %v3022, 0.2
    %v3083 = vmul.f32 %v3025, 0.2
    %v3084 = vmul.f32 %v3030, 0.2
    %v3085 = vmul.f32 %v3033, 0.2
    %v3086 = vmul.f32 %v3038, 0.2
    %v3087 = vmul.f32 %v3041, 0.2
    %v3088 = vmul.f32 %v3046, 0.2
    %v3089 = vmul.f32 %v3049, 0.2
    %v3090 = vmul.f32 %v3054, 0.2
    %v3091 = vmul.f32 %v3057, 0.2
    %v3092 = vsel %vm3060, %v2998, %v3076
    %v3093 = vsel %vm3061, %v3001, %v3077
    %v3094 = vsel %vm3062, %v3006, %v3078
    %v3095 = vsel %vm3063, %v3009, %v3079
    %v3096 = vsel %vm3064, %v3014, %v3080
    %v3097 = vsel %vm3065, %v3017, %v3081
    %v3098 = vsel %vm3066, %v3022, %v3082
    %v3099 = vsel %vm3067, %v3025, %v3083
    %v3100 = vsel %vm3068, %v3030, %v3084
    %v3101 = vsel %vm3069, %v3033, %v3085
    %v3102 = vsel %vm3070, %v3038, %v3086
    %v3103 = vsel %vm3071, %v3041, %v3087
    %v3104 = vsel %vm3072, %v3046, %v3088
    %v3105 = vsel %vm3073, %v3049, %v3089
    %v3106 = vsel %vm3074, %v3054, %v3090
    %v3107 = vsel %vm3075, %v3057, %v3091
    %v3108 = vpack.c.bf16 %v3093, %v3092
    %v3109 = vpack.c.bf16 %v3095, %v3094
    %v3110 = vpack.c.bf16 %v3097, %v3096
    %v3111 = vpack.c.bf16 %v3099, %v3098
    %v3112 = vpack.c.bf16 %v3101, %v3100
    %v3113 = vpack.c.bf16 %v3103, %v3102
    %v3114 = vpack.c.bf16 %v3105, %v3104
    %v3115 = vpack.c.bf16 %v3107, %v3106
    %v3116 = vld [vmem:[#allocation10] sm:$0xf]
    %v3117 = vld [vmem:[#allocation10 + $0x4] sm:$0xf]
    %v3118 = vld [vmem:[#allocation10 + $0x8] sm:$0xf]
    %v3119 = vld [vmem:[#allocation10 + $0xc] sm:$0xf]
    %v3120 = vld [vmem:[#allocation10 + $0x10] sm:$0xf]
    %v3121 = vld [vmem:[#allocation10 + $0x14] sm:$0xf]
    %v3122 = vld [vmem:[#allocation10 + $0x18] sm:$0xf]
    %v3123 = vld [vmem:[#allocation10 + $0x1c] sm:$0xf]
    %v3124 = vld [vmem:[#allocation10 + $0x20] sm:$0xf]
    %v3125 = vld [vmem:[#allocation10 + $0x24] sm:$0xf]
    %v3126 = vld [vmem:[#allocation10 + $0x28] sm:$0xf]
    %v3127 = vld [vmem:[#allocation10 + $0x2c] sm:$0xf]
    %v3128 = vld [vmem:[#allocation10 + $0x30] sm:$0xf]
    %v3129 = vld [vmem:[#allocation10 + $0x34] sm:$0xf]
    %v3130 = vld [vmem:[#allocation10 + $0x38] sm:$0xf]
    %v3131 = vld [vmem:[#allocation10 + $0x3c] sm:$0xf]
    %v3132 = vld [vmem:[%s8] sm:$0x1]
    %v3134 = vlaneseq
    %v3135 = vshrl.u32 %v3134, 7
    %v3136 = vsub.s32 0, %v3135
    %v3137 = vrot.slane %v3132, %v3136
    %v3155 = vunpack.c.l.b16 %v3116
    %v3156 = vunpack.c.l.b16 %v3117
    %v3157 = vunpack.c.l.b16 %v3118
    %v3158 = vunpack.c.l.b16 %v3119
    %v3159 = vunpack.c.l.b16 %v3120
    %v3160 = vunpack.c.l.b16 %v3121
    %v3161 = vunpack.c.l.b16 %v3122
    %v3162 = vunpack.c.l.b16 %v3123
    %v3163 = vunpack.c.l.b16 %v3124
    %v3164 = vunpack.c.l.b16 %v3125
    %v3165 = vunpack.c.l.b16 %v3126
    %v3166 = vunpack.c.l.b16 %v3127
    %v3167 = vunpack.c.l.b16 %v3128
    %v3168 = vunpack.c.l.b16 %v3129
    %v3169 = vunpack.c.l.b16 %v3130
    %v3170 = vunpack.c.l.b16 %v3131
    %v3171 = vpack.c.b16 %v3156, %v3155
    %v3172 = vpack.c.b16 %v3158, %v3157
    %v3173 = vpack.c.b16 %v3160, %v3159
    %v3174 = vpack.c.b16 %v3162, %v3161
    %v3175 = vpack.c.b16 %v3164, %v3163
    %v3176 = vpack.c.b16 %v3166, %v3165
    %v3177 = vpack.c.b16 %v3168, %v3167
    %v3178 = vpack.c.b16 %v3170, %v3169
    %3187 = vmatprep.subr.bf16.mxu0 0
    %3188 = vmatpush1.bf16.msra.mxu0 %v3178
    %3189 = vmatprep.subr.bf16.mxu0 0
    %3190 = vmatpush1.bf16.msra.mxu0 %v3177
    %3191 = vmatprep.subr.bf16.mxu0 0
    %3192 = vmatpush1.bf16.msra.mxu0 %v3176
    %3193 = vmatprep.subr.bf16.mxu0 0
    %3194 = vmatpush1.bf16.msra.mxu0 %v3175
    %3195 = vmatprep.subr.bf16.mxu0 0
    %3196 = vmatpush1.bf16.msra.mxu0 %v3174
    %3197 = vmatprep.subr.bf16.mxu0 0
    %3198 = vmatpush1.bf16.msra.mxu0 %v3173
    %3199 = vmatprep.subr.bf16.mxu0 0
    %3200 = vmatpush1.bf16.msra.mxu0 %v3172
    %3201 = vmatprep.subr.bf16.mxu0 0
    %3202 = vmatpush1.bf16.msra.mxu0 %v3171
    %3203 = vmatprep.subr.bf16.mxu0 0
    %3204 = vmatpush2.bf16.msra.mxu0 0
    %3205 = vmatprep.subr.bf16.mxu0 0
    %3206 = vmatpush2.bf16.msra.mxu0 0
    %3207 = vmatprep.subr.bf16.mxu0 0
    %3208 = vmatpush2.bf16.msra.mxu0 0
    %3209 = vmatprep.subr.bf16.mxu0 0
    %3210 = vmatpush2.bf16.msra.mxu0 0
    %3211 = vmatprep.subr.bf16.mxu0 0
    %3212 = vmatpush2.bf16.msra.mxu0 0
    %3213 = vmatprep.subr.bf16.mxu0 0
    %3214 = vmatpush2.bf16.msra.mxu0 0
    %3215 = vmatprep.subr.bf16.mxu0 0
    %3216 = vmatpush2.bf16.msra.mxu0 0
    %3217 = vmatprep.subr.bf16.mxu0 0
    %3218 = vmatpush2.bf16.msra.mxu0 0
    %3219 = vmatprep.mubr.bf16.mxu0 0
    %3220 = vmatmul.mubr.bf16.gmra.mxu0 %v3108
    %v3221 = vpop.f32.mrf.mxu0
    %v3222 = vadd.f32 %v3137, %v3221
    %v3223 = vpop.f32.mrf.mxu0
    %v3224 = vpop.f32.mrf.mxu0
    %v3225 = vadd.f32 %v3137, %v3224
    %v3226 = vpop.f32.mrf.mxu0
    %3227 = vmatprep.mubr.bf16.mxu0 0
    %3228 = vmatmul.mubr.bf16.gmra.mxu0 %v3109
    %v3229 = vpop.f32.mrf.mxu0
    %v3230 = vadd.f32 %v3137, %v3229
    %v3231 = vpop.f32.mrf.mxu0
    %v3232 = vpop.f32.mrf.mxu0
    %v3233 = vadd.f32 %v3137, %v3232
    %v3234 = vpop.f32.mrf.mxu0
    %3235 = vmatprep.mubr.bf16.mxu0 0
    %3236 = vmatmul.mubr.bf16.gmra.mxu0 %v3110
    %v3237 = vpop.f32.mrf.mxu0
    %v3238 = vadd.f32 %v3137, %v3237
    %v3239 = vpop.f32.mrf.mxu0
    %v3240 = vpop.f32.mrf.mxu0
    %v3241 = vadd.f32 %v3137, %v3240
    %v3242 = vpop.f32.mrf.mxu0
    %3243 = vmatprep.mubr.bf16.mxu0 0
    %3244 = vmatmul.mubr.bf16.gmra.mxu0 %v3111
    %v3245 = vpop.f32.mrf.mxu0
    %v3246 = vadd.f32 %v3137, %v3245
    %v3247 = vpop.f32.mrf.mxu0
    %v3248 = vpop.f32.mrf.mxu0
    %v3249 = vadd.f32 %v3137, %v3248
    %v3250 = vpop.f32.mrf.mxu0
    %3251 = vmatprep.mubr.bf16.mxu0 0
    %3252 = vmatmul.mubr.bf16.gmra.mxu0 %v3112
    %v3253 = vpop.f32.mrf.mxu0
    %v3254 = vadd.f32 %v3137, %v3253
    %v3255 = vpop.f32.mrf.mxu0
    %v3256 = vpop.f32.mrf.mxu0
    %v3257 = vadd.f32 %v3137, %v3256
    %v3258 = vpop.f32.mrf.mxu0
    %3259 = vmatprep.mubr.bf16.mxu0 0
    %3260 = vmatmul.mubr.bf16.gmra.mxu0 %v3113
    %v3261 = vpop.f32.mrf.mxu0
    %v3262 = vadd.f32 %v3137, %v3261
    %v3263 = vpop.f32.mrf.mxu0
    %v3264 = vpop.f32.mrf.mxu0
    %v3265 = vadd.f32 %v3137, %v3264
    %v3266 = vpop.f32.mrf.mxu0
    %3267 = vmatprep.mubr.bf16.mxu0 0
    %3268 = vmatmul.mubr.bf16.gmra.mxu0 %v3114
    %v3269 = vpop.f32.mrf.mxu0
    %v3270 = vadd.f32 %v3137, %v3269
    %v3271 = vpop.f32.mrf.mxu0
    %v3272 = vpop.f32.mrf.mxu0
    %v3273 = vadd.f32 %v3137, %v3272
    %v3274 = vpop.f32.mrf.mxu0
    %3275 = vmatprep.mubr.bf16.mxu0 0
    %3276 = vmatmul.mubr.bf16.gmra.mxu0 %v3115
    %v3277 = vpop.f32.mrf.mxu0
    %v3278 = vadd.f32 %v3137, %v3277
    %v3279 = vpop.f32.mrf.mxu0
    %v3280 = vpop.f32.mrf.mxu0
    %v3281 = vadd.f32 %v3137, %v3280
    %v3282 = vpop.f32.mrf.mxu0
    %3283 = vdwg.mxu0
    %vm3284 = vcmp.ge.f32.partialorder %v3222, 0.0
    %vm3285 = vcmp.ge.f32.partialorder %v3225, 0.0
    %vm3286 = vcmp.ge.f32.partialorder %v3230, 0.0
    %vm3287 = vcmp.ge.f32.partialorder %v3233, 0.0
    %vm3288 = vcmp.ge.f32.partialorder %v3238, 0.0
    %vm3289 = vcmp.ge.f32.partialorder %v3241, 0.0
    %vm3290 = vcmp.ge.f32.partialorder %v3246, 0.0
    %vm3291 = vcmp.ge.f32.partialorder %v3249, 0.0
    %vm3292 = vcmp.ge.f32.partialorder %v3254, 0.0
    %vm3293 = vcmp.ge.f32.partialorder %v3257, 0.0
    %vm3294 = vcmp.ge.f32.partialorder %v3262, 0.0
    %vm3295 = vcmp.ge.f32.partialorder %v3265, 0.0
    %vm3296 = vcmp.ge.f32.partialorder %v3270, 0.0
    %vm3297 = vcmp.ge.f32.partialorder %v3273, 0.0
    %vm3298 = vcmp.ge.f32.partialorder %v3278, 0.0
    %vm3299 = vcmp.ge.f32.partialorder %v3281, 0.0
    %v3300 = vmul.f32 %v3222, 0.2
    %v3301 = vmul.f32 %v3225, 0.2
    %v3302 = vmul.f32 %v3230, 0.2
    %v3303 = vmul.f32 %v3233, 0.2
    %v3304 = vmul.f32 %v3238, 0.2
    %v3305 = vmul.f32 %v3241, 0.2
    %v3306 = vmul.f32 %v3246, 0.2
    %v3307 = vmul.f32 %v3249, 0.2
    %v3308 = vmul.f32 %v3254, 0.2
    %v3309 = vmul.f32 %v3257, 0.2
    %v3310 = vmul.f32 %v3262, 0.2
    %v3311 = vmul.f32 %v3265, 0.2
    %v3312 = vmul.f32 %v3270, 0.2
    %v3313 = vmul.f32 %v3273, 0.2
    %v3314 = vmul.f32 %v3278, 0.2
    %v3315 = vmul.f32 %v3281, 0.2
    %v3316 = vsel %vm3284, %v3222, %v3300
    %v3317 = vsel %vm3285, %v3225, %v3301
    %v3318 = vsel %vm3286, %v3230, %v3302
    %v3319 = vsel %vm3287, %v3233, %v3303
    %v3320 = vsel %vm3288, %v3238, %v3304
    %v3321 = vsel %vm3289, %v3241, %v3305
    %v3322 = vsel %vm3290, %v3246, %v3306
    %v3323 = vsel %vm3291, %v3249, %v3307
    %v3324 = vsel %vm3292, %v3254, %v3308
    %v3325 = vsel %vm3293, %v3257, %v3309
    %v3326 = vsel %vm3294, %v3262, %v3310
    %v3327 = vsel %vm3295, %v3265, %v3311
    %v3328 = vsel %vm3296, %v3270, %v3312
    %v3329 = vsel %vm3297, %v3273, %v3313
    %v3330 = vsel %vm3298, %v3278, %v3314
    %v3331 = vsel %vm3299, %v3281, %v3315
    %v3332 = vld [vmem:[%s9] sm:$0x1]
    %v3334 = vlaneseq
    %v3335 = vshrl.u32 %v3334, 7
    %v3336 = vsub.s32 0, %v3335
    %v3337 = vrot.slane %v3332, %v3336
    %v3339 = vmul.f32 %v3316, %v3337
    %v3340 = vmul.f32 %v3317, %v3337
    %v3341 = vmul.f32 %v3318, %v3337
    %v3342 = vmul.f32 %v3319, %v3337
    %v3343 = vmul.f32 %v3320, %v3337
    %v3344 = vmul.f32 %v3321, %v3337
    %v3345 = vmul.f32 %v3322, %v3337
    %v3346 = vmul.f32 %v3323, %v3337
    %v3347 = vmul.f32 %v3324, %v3337
    %v3348 = vmul.f32 %v3325, %v3337
    %v3349 = vmul.f32 %v3326, %v3337
    %v3350 = vmul.f32 %v3327, %v3337
    %v3351 = vmul.f32 %v3328, %v3337
    %v3352 = vmul.f32 %v3329, %v3337
    %v3353 = vmul.f32 %v3330, %v3337
    %v3354 = vmul.f32 %v3331, %v3337
    %3355 = vadd.xlane.f32.xlu0 %v3339
    %v3356 = vpop.xlane.xlu0 %3355
    %3357 = vadd.xlane.f32.xlu0 %v3340
    %v3358 = vpop.xlane.xlu0 %3357
    %3359 = vadd.xlane.f32.xlu0 %v3341
    %v3360 = vpop.xlane.xlu0 %3359
    %3361 = vadd.xlane.f32.xlu0 %v3342
    %v3362 = vpop.xlane.xlu0 %3361
    %3363 = vadd.xlane.f32.xlu0 %v3343
    %v3364 = vpop.xlane.xlu0 %3363
    %3365 = vadd.xlane.f32.xlu0 %v3344
    %v3366 = vpop.xlane.xlu0 %3365
    %3367 = vadd.xlane.f32.xlu0 %v3345
    %v3368 = vpop.xlane.xlu0 %3367
    %3369 = vadd.xlane.f32.xlu0 %v3346
    %v3370 = vpop.xlane.xlu0 %3369
    %3371 = vadd.xlane.f32.xlu0 %v3347
    %v3372 = vpop.xlane.xlu0 %3371
    %3373 = vadd.xlane.f32.xlu0 %v3348
    %v3374 = vpop.xlane.xlu0 %3373
    %3375 = vadd.xlane.f32.xlu0 %v3349
    %v3376 = vpop.xlane.xlu0 %3375
    %3377 = vadd.xlane.f32.xlu0 %v3350
    %v3378 = vpop.xlane.xlu0 %3377
    %3379 = vadd.xlane.f32.xlu0 %v3351
    %v3380 = vpop.xlane.xlu0 %3379
    %3381 = vadd.xlane.f32.xlu0 %v3352
    %v3382 = vpop.xlane.xlu0 %3381
    %3383 = vadd.xlane.f32.xlu0 %v3353
    %v3384 = vpop.xlane.xlu0 %3383
    %3385 = vadd.xlane.f32.xlu0 %v3354
    %v3386 = vpop.xlane.xlu0 %3385
    %v3403 = vlaneseq
    %v3404 = vand.u32 %v3403, 127
    %v3405 = vlaneseq
    %v3406 = vshrl.u32 %v3405, 7
    %v3407 = vsub.s32 %v3404, %v3406
    %v3408 = vrot.slane %v3356, %v3407
    %v3409 = vadd.s32 %v3404, 4294967288
    %v3410 = vlaneseq
    %v3411 = vshrl.u32 %v3410, 7
    %v3412 = vsub.s32 %v3409, %v3411
    %v3413 = vrot.slane %v3358, %v3412
    %vm3414 = vcmask 130112
    %v3415 = vsel %vm3414, %v3413, %v3408
    %v3416 = vadd.s32 %v3404, 4294967280
    %v3417 = vlaneseq
    %v3418 = vshrl.u32 %v3417, 7
    %v3419 = vsub.s32 %v3416, %v3418
    %v3420 = vrot.slane %v3360, %v3419
    %vm3421 = vcmask 195712
    %v3422 = vsel %vm3421, %v3420, %v3415
    %v3423 = vadd.s32 %v3404, 4294967272
    %v3424 = vlaneseq
    %v3425 = vshrl.u32 %v3424, 7
    %v3426 = vsub.s32 %v3423, %v3425
    %v3427 = vrot.slane %v3362, %v3426
    %vm3428 = vcmask 261312
    %v3429 = vsel %vm3428, %v3427, %v3422
    %v3430 = vadd.s32 %v3404, 4294967264
    %v3431 = vlaneseq
    %v3432 = vshrl.u32 %v3431, 7
    %v3433 = vsub.s32 %v3430, %v3432
    %v3434 = vrot.slane %v3364, %v3433
    %vm3435 = vcmask 326912
    %v3436 = vsel %vm3435, %v3434, %v3429
    %v3437 = vadd.s32 %v3404, 4294967256
    %v3438 = vlaneseq
    %v3439 = vshrl.u32 %v3438, 7
    %v3440 = vsub.s32 %v3437, %v3439
    %v3441 = vrot.slane %v3366, %v3440
    %vm3442 = vcmask 392512
    %v3443 = vsel %vm3442, %v3441, %v3436
    %v3444 = vadd.s32 %v3404, 4294967248
    %v3445 = vlaneseq
    %v3446 = vshrl.u32 %v3445, 7
    %v3447 = vsub.s32 %v3444, %v3446
    %v3448 = vrot.slane %v3368, %v3447
    %vm3449 = vcmask 458112
    %v3450 = vsel %vm3449, %v3448, %v3443
    %v3451 = vadd.s32 %v3404, 4294967240
    %v3452 = vlaneseq
    %v3453 = vshrl.u32 %v3452, 7
    %v3454 = vsub.s32 %v3451, %v3453
    %v3455 = vrot.slane %v3370, %v3454
    %vm3456 = vcmask 523712
    %v3457 = vsel %vm3456, %v3455, %v3450
    %v3458 = vadd.s32 %v3404, 4294967232
    %v3459 = vlaneseq
    %v3460 = vshrl.u32 %v3459, 7
    %v3461 = vsub.s32 %v3458, %v3460
    %v3462 = vrot.slane %v3372, %v3461
    %vm3463 = vcmask 589312
    %v3464 = vsel %vm3463, %v3462, %v3457
    %v3465 = vadd.s32 %v3404, 4294967224
    %v3466 = vlaneseq
    %v3467 = vshrl.u32 %v3466, 7
    %v3468 = vsub.s32 %v3465, %v3467
    %v3469 = vrot.slane %v3374, %v3468
    %vm3470 = vcmask 654912
    %v3471 = vsel %vm3470, %v3469, %v3464
    %v3472 = vadd.s32 %v3404, 4294967216
    %v3473 = vlaneseq
    %v3474 = vshrl.u32 %v3473, 7
    %v3475 = vsub.s32 %v3472, %v3474
    %v3476 = vrot.slane %v3376, %v3475
    %vm3477 = vcmask 720512
    %v3478 = vsel %vm3477, %v3476, %v3471
    %v3479 = vadd.s32 %v3404, 4294967208
    %v3480 = vlaneseq
    %v3481 = vshrl.u32 %v3480, 7
    %v3482 = vsub.s32 %v3479, %v3481
    %v3483 = vrot.slane %v3378, %v3482
    %vm3484 = vcmask 786112
    %v3485 = vsel %vm3484, %v3483, %v3478
    %v3486 = vadd.s32 %v3404, 4294967200
    %v3487 = vlaneseq
    %v3488 = vshrl.u32 %v3487, 7
    %v3489 = vsub.s32 %v3486, %v3488
    %v3490 = vrot.slane %v3380, %v3489
    %vm3491 = vcmask 851712
    %v3492 = vsel %vm3491, %v3490, %v3485
    %v3493 = vadd.s32 %v3404, 4294967192
    %v3494 = vlaneseq
    %v3495 = vshrl.u32 %v3494, 7
    %v3496 = vsub.s32 %v3493, %v3495
    %v3497 = vrot.slane %v3382, %v3496
    %vm3498 = vcmask 917312
    %v3499 = vsel %vm3498, %v3497, %v3492
    %v3500 = vadd.s32 %v3404, 4294967184
    %v3501 = vlaneseq
    %v3502 = vshrl.u32 %v3501, 7
    %v3503 = vsub.s32 %v3500, %v3502
    %v3504 = vrot.slane %v3384, %v3503
    %vm3505 = vcmask 982912
    %v3506 = vsel %vm3505, %v3504, %v3499
    %v3507 = vadd.s32 %v3404, 4294967176
    %v3508 = vlaneseq
    %v3509 = vshrl.u32 %v3508, 7
    %v3510 = vsub.s32 %v3507, %v3509
    %v3511 = vrot.slane %v3386, %v3510
    %vm3512 = vcmask 1048512
    %v3513 = vsel %vm3512, %v3511, %v3506
    %3515 = vst [vmem:[#allocation11] sm:$0x1] %v3513
    // Predicated region
    $region62: #{tpu_custom_call.1} parent=1 // pred_check
      _
    $region63: #{tpu_custom_call.1} parent=1 // pred_check_branch
      %3517 = sbr.rel (0) target = $region65
    $region64: #{tpu_custom_call.1} parent=1 // pred_region
      %s3519 = ssub.s32 16, 16
      %3520 = vsyncadd [#allocation4], %s3519
      %s3522 = sshll.u32 [#allocation11], 4
      %s3523 = int_to_ptr.vmem [resolvable:$true] %s3522
      %3525 = dma.vmem_to_hbm [thread:$0]  %s3523, 16, %s10, [#allocation4]
    $region65: #{tpu_custom_call.1} parent=1 // pred_fallthru
      _
    // Predicated region
    $region66: #{tpu_custom_call.1} parent=1 // pred_check
      _
    $region67: #{tpu_custom_call.1} parent=1 // pred_check_branch
      %3527 = sbr.rel (0) target = $region69
    $region68: #{tpu_custom_call.1} parent=1 // pred_region
      %3528 = dma.done [#allocation4], 16
    $region69: #{tpu_custom_call.1} parent=1 // pred_fallthru
      _
    %3529 = vsyncpa [#allocation3], 1
    %3530 = vsyncpa [#allocation6], 1
    %3531 = vsyncpa [#allocation9], 1
    %3532 = vsyncpa [#allocation4], 1

</llo_original>
